<compile_context>
chip_gen: v6e
topology: v6e:2x2x1
jax: 0.10.0
libtpu: 0.0.40
codegen_flags: <defaults>
</compile_context>

<pallas_src>
import jax
import jax.numpy as jnp
from jax.experimental import pallas as pl
from jax.experimental.pallas import tpu as pltpu

# painter layer dims
LAYER_DIMS = [64, 1024, 512, 256, 128, 64, 32]            # input_dim = 64
# hidden/output dims rounded up to a full 128-lane vreg width
PADDED_DIMS = [LAYER_DIMS[0]] + [-(-d // 128) * 128 for d in LAYER_DIMS[1:]]
NUM_LAYERS = len(LAYER_DIMS) - 1
BIAS_WIDTHS = tuple(PADDED_DIMS[1:])                      # (1024,512,256,128,128,128)
BIAS_OFFSETS = tuple(int(sum(BIAS_WIDTHS[:i])) for i in range(NUM_LAYERS))
BIAS_TOTAL = int(sum(BIAS_WIDTHS))                        # 2176 (all offsets 128-aligned)
OUT_DIM = LAYER_DIMS[-1]                                  # 32


def _round_up(n, m):
    return -(-n // m) * m


def _cdiv(a, b):
    return -(-a // b)


def _mlp_kernel(x_ref, b_ref, w1, w2, w3, w4, w5, w6, o_ref):
    """Whole MLP on one activation tile: 5x(matmul+bias+ReLU), 1x(matmul+bias+tanh).

    Matmul operands are bf16 (weights arrive bf16, activations are cast);
    accumulation and all vector math (bias add, ReLU, tanh) stay f32.
    """
    ws = (w1, w2, w3, w4, w5, w6)
    h = x_ref[...].astype(jnp.bfloat16)                   # (TB, 64)
    for i in range(NUM_LAYERS):
        off, width = BIAS_OFFSETS[i], BIAS_WIDTHS[i]
        bias = b_ref[:, off:off + width]                  # f32 (1, width), 128-aligned
        z = jnp.dot(h, ws[i][...],
                    preferred_element_type=jnp.float32) + bias
        if i < NUM_LAYERS - 1:
            h = jnp.maximum(z, 0.0).astype(jnp.bfloat16)  # ReLU in f32, recast for MXU
        else:
            h = jnp.tanh(z)                               # f32, (TB, 128)
    # Store only the 32 real output columns: 4x fewer output HBM bytes and no
    # post-kernel compaction slice (review item).
    o_ref[...] = h[:, :OUT_DIM]


def pack_params(params):
    """Pad tail layers to 128 lanes, cast weights to bf16, concat biases.

    params: list of (W (in, out) f32, b (1, out) f32).
    Returns (weights_bf16 list, bias_cat f32 (1, BIAS_TOTAL)).
    Zero-padding is exact: padded ReLU columns stay 0 and padded weight rows are 0.
    """
    ws, bs = [], []
    for i, (w, b) in enumerate(params):
        fin, fout = w.shape
        pin, pout = PADDED_DIMS[i], PADDED_DIMS[i + 1]
        w_p = jnp.zeros((pin, pout), jnp.float32).at[:fin, :fout].set(w)
        b_p = jnp.zeros((1, pout), jnp.float32).at[:, :fout].set(b)
        ws.append(w_p.astype(jnp.bfloat16))
        bs.append(b_p)
    return ws, jnp.concatenate(bs, axis=1)


def _tile_cap():
    """Batch-tile cap: 1024 on v6e/v7x, 512 on v5e/older (16 MiB scoped-VMEM default
    and a 128-deep MXU that M=512 already saturates)."""
    try:
        kind = jax.devices()[0].device_kind.lower()
    except Exception:
        return 512
    return 1024 if ("v6" in kind or "v7" in kind) else 512


def _choose_tiling(batch, cap):
    """Return (tile_rows, num_tiles).

    * batch < 256: single tile, rounded up to a sublane multiple (8).
    * batch >= 256: at least 2 tiles (both v7x TensorCores get work via the
      'parallel' grid axis) and tiles balanced to the actual batch so zero-row
      padding waste stays below one tile.
    """
    if batch < 256:
        tb = _round_up(max(batch, 1), 8)
        return tb, 1
    n_tiles = max(_cdiv(batch, cap), 2)
    tb = _round_up(_cdiv(batch, n_tiles), 8)
    n_tiles = max(_cdiv(batch, tb), 2)
    return tb, n_tiles


def simple_mlp_forward(x, packed):
    """x: (B, input_dim) f32; packed: output of pack_params. Returns (B, 32) f32."""
    ws, bias_cat = packed
    batch, in_dim = x.shape

    tb, n_tiles = _choose_tiling(batch, _tile_cap())
    b_pad = tb * n_tiles
    if b_pad != batch:
        x = jnp.pad(x, ((0, b_pad - batch), (0, 0)))

    in_specs = [
        pl.BlockSpec((tb, in_dim), lambda i: (i, 0)),            # pipelined act tile
        pl.BlockSpec(bias_cat.shape, lambda i: (0, 0)),          # all biases, 1 DMA
    ] + [pl.BlockSpec(w.shape, lambda i: (0, 0)) for w in ws]    # VMEM-resident weights

    flops = 2 * b_pad * sum(PADDED_DIMS[i] * PADDED_DIMS[i + 1]
                            for i in range(NUM_LAYERS))
    bytes_accessed = (x.size * 4 + bias_cat.size * 4
                      + sum(int(w.size) * 2 for w in ws)
                      + b_pad * OUT_DIM * 4)
    cost = pl.CostEstimate(flops=flops,
                           transcendentals=b_pad * PADDED_DIMS[-1],
                           bytes_accessed=bytes_accessed)

    out = pl.pallas_call(
        _mlp_kernel,
        out_shape=jax.ShapeDtypeStruct((b_pad, OUT_DIM), jnp.float32),
        grid=(n_tiles,),
        in_specs=in_specs,
        out_specs=pl.BlockSpec((tb, OUT_DIM), lambda i: (i, 0)),
        compiler_params=pltpu.CompilerParams(
            dimension_semantics=("parallel",)),
        cost_estimate=cost,
    )(x, bias_cat, *ws)

    return out if b_pad == batch else out[:batch]


def init_params(key, layer_dims):
    """Deterministic init mirroring torch.nn.Linear default (uniform +-1/sqrt(in))."""
    params = []
    for i in range(len(layer_dims) - 1):
        fan_in, fan_out = layer_dims[i], layer_dims[i + 1]
        key, kw, kb = jax.random.split(key, 3)
        bound = 1.0 / jnp.sqrt(fan_in)
        w = jax.random.uniform(kw, (fan_in, fan_out), jnp.float32, -bound, bound)
        b = jax.random.uniform(kb, (1, fan_out), jnp.float32, -bound, bound)
        params.append((w, b))
    return params


def reference_forward(x, params):
    h = x
    n = len(params)
    for i, (w, b) in enumerate(params):
        h = h @ w + b
        if i < n - 1:
            h = jnp.maximum(h, 0.0)
        else:
            h = jnp.tanh(h)
    return h


if __name__ == "__main__":
    key = jax.random.PRNGKey(0)
    kx, kx2, kp = jax.random.split(key, 3)

    params = init_params(kp, LAYER_DIMS)
    packed = pack_params(params)

    # Small single-tile batch.
    batch = 8
    x = jax.random.normal(kx, (batch, LAYER_DIMS[0]), jnp.float32)
    out = jax.block_until_ready(simple_mlp_forward(x, packed))
    ref = reference_forward(x, params)
    assert out.shape == (batch, LAYER_DIMS[-1]), out.shape
    max_err = float(jnp.max(jnp.abs(out - ref)))
    # bf16 matmul operands with f32 accumulation -> ~1e-2-scale absolute error on
    # a tanh-bounded output.
    assert max_err < 3e-2, max_err

    # Non-divisible multi-tile batch (exercises balanced tiling + row padding).
    batch2 = 300
    x2 = jax.random.normal(kx2, (batch2, LAYER_DIMS[0]), jnp.float32)
    out2 = jax.block_until_ready(simple_mlp_forward(x2, packed))
    ref2 = reference_forward(x2, params)
    assert out2.shape == (batch2, LAYER_DIMS[-1]), out2.shape
    max_err2 = float(jnp.max(jnp.abs(out2 - ref2)))
    assert max_err2 < 3e-2, max_err2

    print("KERNEL_OK")
</pallas_src>

<mosaic_0001>
module attributes {stable_mosaic.version = 11 : i64} {
  func.func @_mlp_kernel(%arg0: i32, %arg1: memref<8x64xf32, #tpu.memory_space<vmem>>, %arg2: memref<1x2176xf32, #tpu.memory_space<vmem>>, %arg3: memref<64x1024xbf16, #tpu.memory_space<vmem>>, %arg4: memref<1024x512xbf16, #tpu.memory_space<vmem>>, %arg5: memref<512x256xbf16, #tpu.memory_space<vmem>>, %arg6: memref<256x128xbf16, #tpu.memory_space<vmem>>, %arg7: memref<128x128xbf16, #tpu.memory_space<vmem>>, %arg8: memref<128x128xbf16, #tpu.memory_space<vmem>>, %arg9: memref<8x32xf32, #tpu.memory_space<vmem>>) attributes {dimension_semantics = [#tpu.dimension_semantics<parallel>], iteration_bounds = array<i64: 1>, scalar_prefetch = 0 : i64, scratch_operands = 0 : i64, tpu.core_type = #tpu.core_type<tc>, window_params = [{transform_indices = @transform_0, window_bounds = array<i64: 8, 64>}, {pipeline_mode = #tpu.pipeline_mode<synchronous>, transform_indices = @transform_1, window_bounds = array<i64: 1, 2176>}, {pipeline_mode = #tpu.pipeline_mode<synchronous>, transform_indices = @transform_2, window_bounds = array<i64: 64, 1024>}, {pipeline_mode = #tpu.pipeline_mode<synchronous>, transform_indices = @transform_3, window_bounds = array<i64: 1024, 512>}, {pipeline_mode = #tpu.pipeline_mode<synchronous>, transform_indices = @transform_4, window_bounds = array<i64: 512, 256>}, {pipeline_mode = #tpu.pipeline_mode<synchronous>, transform_indices = @transform_5, window_bounds = array<i64: 256, 128>}, {pipeline_mode = #tpu.pipeline_mode<synchronous>, transform_indices = @transform_6, window_bounds = array<i64: 128, 128>}, {pipeline_mode = #tpu.pipeline_mode<synchronous>, transform_indices = @transform_7, window_bounds = array<i64: 128, 128>}, {transform_indices = @transform_8, window_bounds = array<i64: 8, 32>}]} {
    %c0 = arith.constant 0 : index
    %c0_0 = arith.constant 0 : index
    %0 = vector.load %arg1[%c0, %c0_0] : memref<8x64xf32, #tpu.memory_space<vmem>>, vector<8x64xf32>
    %1 = arith.truncf %0 : vector<8x64xf32> to vector<8x64xbf16>
    %c0_1 = arith.constant 0 : index
    %c0_2 = arith.constant 0 : index
    %2 = vector.load %arg2[%c0_1, %c0_2] : memref<1x2176xf32, #tpu.memory_space<vmem>>, vector<1x1024xf32>
    %c0_3 = arith.constant 0 : index
    %c0_4 = arith.constant 0 : index
    %3 = vector.load %arg3[%c0_3, %c0_4] : memref<64x1024xbf16, #tpu.memory_space<vmem>>, vector<64x1024xbf16>
    %cst = arith.constant dense<0.000000e+00> : vector<8x1024xf32>
    %4 = tpu.matmul %1, %3, %cst {dimension_numbers = #tpu.dot_dimension_numbers<[1], [0], [0], [1], [0, 0, 1, 1], [], []>} : vector<8x64xbf16>, vector<64x1024xbf16>, vector<8x1024xf32> -> vector<8x1024xf32>
    %5 = vector.broadcast %2 : vector<1x1024xf32> to vector<8x1024xf32>
    %6 = arith.addf %4, %5 : vector<8x1024xf32>
    %cst_5 = arith.constant 0.000000e+00 : f32
    %7 = vector.broadcast %cst_5 : f32 to vector<8x1024xf32>
    %8 = arith.maximumf %6, %7 : vector<8x1024xf32>
    %9 = arith.truncf %8 : vector<8x1024xf32> to vector<8x1024xbf16>
    %c0_6 = arith.constant 0 : index
    %c1024 = arith.constant 1024 : index
    %10 = vector.load %arg2[%c0_6, %c1024] : memref<1x2176xf32, #tpu.memory_space<vmem>>, vector<1x512xf32>
    %c0_7 = arith.constant 0 : index
    %c0_8 = arith.constant 0 : index
    %11 = vector.load %arg4[%c0_7, %c0_8] : memref<1024x512xbf16, #tpu.memory_space<vmem>>, vector<1024x512xbf16>
    %cst_9 = arith.constant dense<0.000000e+00> : vector<8x512xf32>
    %12 = tpu.matmul %9, %11, %cst_9 {dimension_numbers = #tpu.dot_dimension_numbers<[1], [0], [0], [1], [0, 0, 1, 1], [], []>} : vector<8x1024xbf16>, vector<1024x512xbf16>, vector<8x512xf32> -> vector<8x512xf32>
    %13 = vector.broadcast %10 : vector<1x512xf32> to vector<8x512xf32>
    %14 = arith.addf %12, %13 : vector<8x512xf32>
    %cst_10 = arith.constant 0.000000e+00 : f32
    %15 = vector.broadcast %cst_10 : f32 to vector<8x512xf32>
    %16 = arith.maximumf %14, %15 : vector<8x512xf32>
    %17 = arith.truncf %16 : vector<8x512xf32> to vector<8x512xbf16>
    %c0_11 = arith.constant 0 : index
    %c1536 = arith.constant 1536 : index
    %18 = vector.load %arg2[%c0_11, %c1536] : memref<1x2176xf32, #tpu.memory_space<vmem>>, vector<1x256xf32>
    %c0_12 = arith.constant 0 : index
    %c0_13 = arith.constant 0 : index
    %19 = vector.load %arg5[%c0_12, %c0_13] : memref<512x256xbf16, #tpu.memory_space<vmem>>, vector<512x256xbf16>
    %cst_14 = arith.constant dense<0.000000e+00> : vector<8x256xf32>
    %20 = tpu.matmul %17, %19, %cst_14 {dimension_numbers = #tpu.dot_dimension_numbers<[1], [0], [0], [1], [0, 0, 1, 1], [], []>} : vector<8x512xbf16>, vector<512x256xbf16>, vector<8x256xf32> -> vector<8x256xf32>
    %21 = vector.broadcast %18 : vector<1x256xf32> to vector<8x256xf32>
    %22 = arith.addf %20, %21 : vector<8x256xf32>
    %cst_15 = arith.constant 0.000000e+00 : f32
    %23 = vector.broadcast %cst_15 : f32 to vector<8x256xf32>
    %24 = arith.maximumf %22, %23 : vector<8x256xf32>
    %25 = arith.truncf %24 : vector<8x256xf32> to vector<8x256xbf16>
    %c0_16 = arith.constant 0 : index
    %c1792 = arith.constant 1792 : index
    %26 = vector.load %arg2[%c0_16, %c1792] : memref<1x2176xf32, #tpu.memory_space<vmem>>, vector<1x128xf32>
    %c0_17 = arith.constant 0 : index
    %c0_18 = arith.constant 0 : index
    %27 = vector.load %arg6[%c0_17, %c0_18] : memref<256x128xbf16, #tpu.memory_space<vmem>>, vector<256x128xbf16>
    %cst_19 = arith.constant dense<0.000000e+00> : vector<8x128xf32>
    %28 = tpu.matmul %25, %27, %cst_19 {dimension_numbers = #tpu.dot_dimension_numbers<[1], [0], [0], [1], [0, 0, 1, 1], [], []>} : vector<8x256xbf16>, vector<256x128xbf16>, vector<8x128xf32> -> vector<8x128xf32>
    %29 = vector.broadcast %26 : vector<1x128xf32> to vector<8x128xf32>
    %30 = arith.addf %28, %29 : vector<8x128xf32>
    %cst_20 = arith.constant 0.000000e+00 : f32
    %31 = vector.broadcast %cst_20 : f32 to vector<8x128xf32>
    %32 = arith.maximumf %30, %31 : vector<8x128xf32>
    %33 = arith.truncf %32 : vector<8x128xf32> to vector<8x128xbf16>
    %c0_21 = arith.constant 0 : index
    %c1920 = arith.constant 1920 : index
    %34 = vector.load %arg2[%c0_21, %c1920] : memref<1x2176xf32, #tpu.memory_space<vmem>>, vector<1x128xf32>
    %c0_22 = arith.constant 0 : index
    %c0_23 = arith.constant 0 : index
    %35 = vector.load %arg7[%c0_22, %c0_23] : memref<128x128xbf16, #tpu.memory_space<vmem>>, vector<128x128xbf16>
    %cst_24 = arith.constant dense<0.000000e+00> : vector<8x128xf32>
    %36 = tpu.matmul %33, %35, %cst_24 {dimension_numbers = #tpu.dot_dimension_numbers<[1], [0], [0], [1], [0, 0, 1, 1], [], []>} : vector<8x128xbf16>, vector<128x128xbf16>, vector<8x128xf32> -> vector<8x128xf32>
    %37 = vector.broadcast %34 : vector<1x128xf32> to vector<8x128xf32>
    %38 = arith.addf %36, %37 : vector<8x128xf32>
    %cst_25 = arith.constant 0.000000e+00 : f32
    %39 = vector.broadcast %cst_25 : f32 to vector<8x128xf32>
    %40 = arith.maximumf %38, %39 : vector<8x128xf32>
    %41 = arith.truncf %40 : vector<8x128xf32> to vector<8x128xbf16>
    %c0_26 = arith.constant 0 : index
    %c2048 = arith.constant 2048 : index
    %42 = vector.load %arg2[%c0_26, %c2048] : memref<1x2176xf32, #tpu.memory_space<vmem>>, vector<1x128xf32>
    %c0_27 = arith.constant 0 : index
    %c0_28 = arith.constant 0 : index
    %43 = vector.load %arg8[%c0_27, %c0_28] : memref<128x128xbf16, #tpu.memory_space<vmem>>, vector<128x128xbf16>
    %cst_29 = arith.constant dense<0.000000e+00> : vector<8x128xf32>
    %44 = tpu.matmul %41, %43, %cst_29 {dimension_numbers = #tpu.dot_dimension_numbers<[1], [0], [0], [1], [0, 0, 1, 1], [], []>} : vector<8x128xbf16>, vector<128x128xbf16>, vector<8x128xf32> -> vector<8x128xf32>
    %45 = vector.broadcast %42 : vector<1x128xf32> to vector<8x128xf32>
    %46 = arith.addf %44, %45 : vector<8x128xf32>
    %47 = math.tanh %46 : vector<8x128xf32>
    %48 = vector.extract_strided_slice %47 {offsets = [0, 0], sizes = [8, 32], strides = [1, 1]} : vector<8x128xf32> to vector<8x32xf32>
    %c0_30 = arith.constant 0 : index
    %c0_31 = arith.constant 0 : index
    %49 = vector.load %arg9[%c0_30, %c0_31] : memref<8x32xf32, #tpu.memory_space<vmem>>, vector<8x32xf32>
    tpu.vector_store %arg9[%c0_30, %c0_31], %48 {strides = array<i32>} : memref<8x32xf32, #tpu.memory_space<vmem>>, vector<8x32xf32>,
    return
  }
  func.func @transform_0(%arg0: i32) -> (i32, i32) {
    %c0_i32 = arith.constant 0 : i32
    %c0_i32_0 = arith.constant 0 : i32
    return %arg0, %c0_i32 : i32, i32
  }
  func.func @transform_1(%arg0: i32) -> (i32, i32) {
    %c0_i32 = arith.constant 0 : i32
    %c0_i32_0 = arith.constant 0 : i32
    %c0_i32_1 = arith.constant 0 : i32
    return %c0_i32, %c0_i32_0 : i32, i32
  }
  func.func @transform_2(%arg0: i32) -> (i32, i32) {
    %c0_i32 = arith.constant 0 : i32
    %c0_i32_0 = arith.constant 0 : i32
    %c0_i32_1 = arith.constant 0 : i32
    return %c0_i32, %c0_i32_0 : i32, i32
  }
  func.func @transform_3(%arg0: i32) -> (i32, i32) {
    %c0_i32 = arith.constant 0 : i32
    %c0_i32_0 = arith.constant 0 : i32
    %c0_i32_1 = arith.constant 0 : i32
    return %c0_i32, %c0_i32_0 : i32, i32
  }
  func.func @transform_4(%arg0: i32) -> (i32, i32) {
    %c0_i32 = arith.constant 0 : i32
    %c0_i32_0 = arith.constant 0 : i32
    %c0_i32_1 = arith.constant 0 : i32
    return %c0_i32, %c0_i32_0 : i32, i32
  }
  func.func @transform_5(%arg0: i32) -> (i32, i32) {
    %c0_i32 = arith.constant 0 : i32
    %c0_i32_0 = arith.constant 0 : i32
    %c0_i32_1 = arith.constant 0 : i32
    return %c0_i32, %c0_i32_0 : i32, i32
  }
  func.func @transform_6(%arg0: i32) -> (i32, i32) {
    %c0_i32 = arith.constant 0 : i32
    %c0_i32_0 = arith.constant 0 : i32
    %c0_i32_1 = arith.constant 0 : i32
    return %c0_i32, %c0_i32_0 : i32, i32
  }
  func.func @transform_7(%arg0: i32) -> (i32, i32) {
    %c0_i32 = arith.constant 0 : i32
    %c0_i32_0 = arith.constant 0 : i32
    %c0_i32_1 = arith.constant 0 : i32
    return %c0_i32, %c0_i32_0 : i32, i32
  }
  func.func @transform_8(%arg0: i32) -> (i32, i32) {
    %c0_i32 = arith.constant 0 : i32
    %c0_i32_0 = arith.constant 0 : i32
    return %arg0, %c0_i32 : i32, i32
  }
}

</mosaic_0001>

<llo_original>
// kernel: tpu_custom_call.1
$region0: #{tpu_custom_call.1}
  #allocation0 [shape = 'u32[]', space=smem, size = 0x4, offset = 0x4, fixed_abs, tag = 'smem constant byte address 0x4 - core index']
  #allocation1 [shape = 'u32[144,128]{1,0:T(1,128)}', space=vmem, size = 0x12000, scoped, tag = 'internal scratch']
  %s0 = inlined_call_operand.hbm [shape: f32[8,64], index: 0, kind: input, shape index: {}]
  %s1 = inlined_call_operand.hbm [shape: f32[1,2176], index: 1, kind: input, shape index: {}]
  %s2 = inlined_call_operand.hbm [shape: bf16[64,1024], index: 2, kind: input, shape index: {}]
  %s3 = inlined_call_operand.hbm [shape: bf16[1024,512], index: 3, kind: input, shape index: {}]
  %s4 = inlined_call_operand.hbm [shape: bf16[512,256], index: 4, kind: input, shape index: {}]
  %s5 = inlined_call_operand.hbm [shape: bf16[256,128], index: 5, kind: input, shape index: {}]
  %s6 = inlined_call_operand.hbm [shape: bf16[128,128], index: 6, kind: input, shape index: {}]
  %s7 = inlined_call_operand.hbm [shape: bf16[128,128], index: 7, kind: input, shape index: {}]
  %s8 = inlined_call_operand.hbm [shape: f32[8,32], index: 8, kind: output, shape index: {}]
  %s9 = sld [smem:[#allocation0]]
  $region74: #{tpu_custom_call.1} parent=0
    _
  %s11 = ssub.s32 1, %s9
  %s12 = scalar_select 0, %s11, %s9
  $region1: #{tpu_custom_call.1} parent=0
    #allocation2 [shape = 'u8[4096]{0}', space=vmem, size = 0x1000, scoped, tag = 'input window, operand 0, single buffered']
    #allocation3 [shape = 's32[1]{0}', space=sflag, size = 0x4, scoped, tag = 'scoped memory for tpu_custom_call.1']
    #allocation4 [shape = 's32[1]{0}', space=sflag, size = 0x4, scoped, tag = 'scoped memory for tpu_custom_call.1']
    #allocation5 [shape = 'u8[8704]{0}', space=vmem, size = 0x2400, scoped, tag = 'input window, operand 1, single buffered']
    #allocation6 [shape = 's32[1]{0}', space=sflag, size = 0x4, scoped, tag = 'scoped memory for tpu_custom_call.1']
    #allocation7 [shape = 'u8[131072]{0}', space=vmem, size = 0x20000, scoped, tag = 'input window, operand 2, single buffered']
    #allocation8 [shape = 'u8[1048576]{0}', space=vmem, size = 0x100000, scoped, tag = 'input window, operand 3, single buffered']
    #allocation9 [shape = 's32[1]{0}', space=sflag, size = 0x4, scoped, tag = 'scoped memory for tpu_custom_call.1']
    #allocation10 [shape = 'u8[262144]{0}', space=vmem, size = 0x40000, scoped, tag = 'input window, operand 4, single buffered']
    #allocation11 [shape = 'u8[65536]{0}', space=vmem, size = 0x10000, scoped, tag = 'input window, operand 5, single buffered']
    #allocation12 [shape = 's32[1]{0}', space=sflag, size = 0x4, scoped, tag = 'scoped memory for tpu_custom_call.1']
    #allocation13 [shape = 'u8[32768]{0}', space=vmem, size = 0x8000, scoped, tag = 'input window, operand 6, single buffered']
    #allocation14 [shape = 'u8[32768]{0}', space=vmem, size = 0x8000, scoped, tag = 'input window, operand 7, single buffered']
    #allocation15 [shape = 's32[1]{0}', space=sflag, size = 0x4, scoped, tag = 'scoped memory for tpu_custom_call.1']
    #allocation16 [shape = 'u8[4096]{0}', space=vmem, size = 0x1000, scoped, tag = 'output window, operand 0, single buffered']
    %13 = vsyncpa [#allocation3], 0
    %14 = vsyncpa [#allocation6], 0
    %15 = vsyncpa [#allocation9], 0
    %16 = vsyncpa [#allocation12], 0
    %17 = vsyncpa [#allocation15], 0
    %18 = vsyncpa [#allocation4], 0
    // Predicated region
    $region2: #{tpu_custom_call.1} parent=1 // pred_check
      _
    $region3: #{tpu_custom_call.1} parent=1 // pred_check_branch
      %20 = sbr.rel (0) target = $region5
    $region4: #{tpu_custom_call.1} parent=1 // pred_region
      %s22 = ssub.s32 128, 128
      %23 = vsyncadd [#allocation3], %s22
      %s25 = sshll.u32 [#allocation2], 4
      %s26 = int_to_ptr.vmem [resolvable:$true] %s25
      %28 = dma.hbm_to_vmem [thread:$0]  %s0, 128, %s26, [#allocation3]
    $region5: #{tpu_custom_call.1} parent=1 // pred_fallthru
      _
    // Predicated region
    $region6: #{tpu_custom_call.1} parent=1 // pred_check
      _
    $region7: #{tpu_custom_call.1} parent=1 // pred_check_branch
      %30 = sbr.rel (0) target = $region9
    $region8: #{tpu_custom_call.1} parent=1 // pred_region
      %s32 = ssub.s32 272, 272
      %33 = vsyncadd [#allocation6], %s32
      %s35 = sshll.u32 [#allocation5], 4
      %s36 = int_to_ptr.vmem [resolvable:$true] %s35
      %38 = dma.hbm_to_vmem [thread:$0]  %s1, 272, %s36, [#allocation6]
    $region9: #{tpu_custom_call.1} parent=1 // pred_fallthru
      _
    // Predicated region
    $region10: #{tpu_custom_call.1} parent=1 // pred_check
      _
    $region11: #{tpu_custom_call.1} parent=1 // pred_check_branch
      %40 = sbr.rel (0) target = $region13
    $region12: #{tpu_custom_call.1} parent=1 // pred_region
      %s42 = ssub.s32 4096, 4096
      %43 = vsyncadd [#allocation6], %s42
      %s44 = sshll.u32 [#allocation7], 4
      %s45 = int_to_ptr.vmem [resolvable:$true] %s44
      %50 = dma.hbm_to_vmem [thread:$0]  %s2, 4096, %s45, [#allocation6], 512, 512, 32
    $region13: #{tpu_custom_call.1} parent=1 // pred_fallthru
      _
    // Predicated region
    $region14: #{tpu_custom_call.1} parent=1 // pred_check
      _
    $region15: #{tpu_custom_call.1} parent=1 // pred_check_branch
      %52 = sbr.rel (0) target = $region17
    $region16: #{tpu_custom_call.1} parent=1 // pred_region
      %s54 = ssub.s32 32768, 32768
      %55 = vsyncadd [#allocation9], %s54
      %s56 = sshll.u32 [#allocation8], 4
      %s57 = int_to_ptr.vmem [resolvable:$true] %s56
      %62 = dma.hbm_to_vmem [thread:$0]  %s3, 32768, %s57, [#allocation9], 256, 256, 16
    $region17: #{tpu_custom_call.1} parent=1 // pred_fallthru
      _
    // Predicated region
    $region18: #{tpu_custom_call.1} parent=1 // pred_check
      _
    $region19: #{tpu_custom_call.1} parent=1 // pred_check_branch
      %64 = sbr.rel (0) target = $region21
    $region20: #{tpu_custom_call.1} parent=1 // pred_region
      %s66 = ssub.s32 8192, 8192
      %67 = vsyncadd [#allocation9], %s66
      %s68 = sshll.u32 [#allocation10], 4
      %s69 = int_to_ptr.vmem [resolvable:$true] %s68
      %74 = dma.hbm_to_vmem [thread:$0]  %s4, 8192, %s69, [#allocation9], 128, 128, 8
    $region21: #{tpu_custom_call.1} parent=1 // pred_fallthru
      _
    // Predicated region
    $region22: #{tpu_custom_call.1} parent=1 // pred_check
      _
    $region23: #{tpu_custom_call.1} parent=1 // pred_check_branch
      %76 = sbr.rel (0) target = $region25
    $region24: #{tpu_custom_call.1} parent=1 // pred_region
      %s78 = ssub.s32 2048, 2048
      %79 = vsyncadd [#allocation12], %s78
      %s80 = sshll.u32 [#allocation11], 4
      %s81 = int_to_ptr.vmem [resolvable:$true] %s80
      %86 = dma.hbm_to_vmem [thread:$0]  %s5, 2048, %s81, [#allocation12], 64, 64, 4
    $region25: #{tpu_custom_call.1} parent=1 // pred_fallthru
      _
    // Predicated region
    $region26: #{tpu_custom_call.1} parent=1 // pred_check
      _
    $region27: #{tpu_custom_call.1} parent=1 // pred_check_branch
      %88 = sbr.rel (0) target = $region29
    $region28: #{tpu_custom_call.1} parent=1 // pred_region
      %s90 = ssub.s32 1024, 1024
      %91 = vsyncadd [#allocation12], %s90
      %s92 = sshll.u32 [#allocation13], 4
      %s93 = int_to_ptr.vmem [resolvable:$true] %s92
      %98 = dma.hbm_to_vmem [thread:$0]  %s6, 1024, %s93, [#allocation12], 64, 64, 4
    $region29: #{tpu_custom_call.1} parent=1 // pred_fallthru
      _
    // Predicated region
    $region30: #{tpu_custom_call.1} parent=1 // pred_check
      _
    $region31: #{tpu_custom_call.1} parent=1 // pred_check_branch
      %100 = sbr.rel (0) target = $region33
    $region32: #{tpu_custom_call.1} parent=1 // pred_region
      %s102 = ssub.s32 1024, 1024
      %103 = vsyncadd [#allocation15], %s102
      %s104 = sshll.u32 [#allocation14], 4
      %s105 = int_to_ptr.vmem [resolvable:$true] %s104
      %110 = dma.hbm_to_vmem [thread:$0]  %s7, 1024, %s105, [#allocation15], 64, 64, 4
    $region33: #{tpu_custom_call.1} parent=1 // pred_fallthru
      _
    // Predicated region
    $region34: #{tpu_custom_call.1} parent=1 // pred_check
      _
    $region35: #{tpu_custom_call.1} parent=1 // pred_check_branch
      %112 = sbr.rel (0) target = $region37
    $region36: #{tpu_custom_call.1} parent=1 // pred_region
      %113 = dma.done [#allocation3], 128
    $region37: #{tpu_custom_call.1} parent=1 // pred_fallthru
      _
    // Predicated region
    $region38: #{tpu_custom_call.1} parent=1 // pred_check
      _
    $region39: #{tpu_custom_call.1} parent=1 // pred_check_branch
      %115 = sbr.rel (0) target = $region41
    $region40: #{tpu_custom_call.1} parent=1 // pred_region
      %116 = dma.done [#allocation6], 272
    $region41: #{tpu_custom_call.1} parent=1 // pred_fallthru
      _
    // Predicated region
    $region42: #{tpu_custom_call.1} parent=1 // pred_check
      _
    $region43: #{tpu_custom_call.1} parent=1 // pred_check_branch
      %118 = sbr.rel (0) target = $region45
    $region44: #{tpu_custom_call.1} parent=1 // pred_region
      %119 = dma.done [#allocation6], 4096
    $region45: #{tpu_custom_call.1} parent=1 // pred_fallthru
      _
    // Predicated region
    $region46: #{tpu_custom_call.1} parent=1 // pred_check
      _
    $region47: #{tpu_custom_call.1} parent=1 // pred_check_branch
      %121 = sbr.rel (0) target = $region49
    $region48: #{tpu_custom_call.1} parent=1 // pred_region
      %122 = dma.done [#allocation9], 32768
    $region49: #{tpu_custom_call.1} parent=1 // pred_fallthru
      _
    // Predicated region
    $region50: #{tpu_custom_call.1} parent=1 // pred_check
      _
    $region51: #{tpu_custom_call.1} parent=1 // pred_check_branch
      %124 = sbr.rel (0) target = $region53
    $region52: #{tpu_custom_call.1} parent=1 // pred_region
      %125 = dma.done [#allocation9], 8192
    $region53: #{tpu_custom_call.1} parent=1 // pred_fallthru
      _
    // Predicated region
    $region54: #{tpu_custom_call.1} parent=1 // pred_check
      _
    $region55: #{tpu_custom_call.1} parent=1 // pred_check_branch
      %127 = sbr.rel (0) target = $region57
    $region56: #{tpu_custom_call.1} parent=1 // pred_region
      %128 = dma.done [#allocation12], 2048
    $region57: #{tpu_custom_call.1} parent=1 // pred_fallthru
      _
    // Predicated region
    $region58: #{tpu_custom_call.1} parent=1 // pred_check
      _
    $region59: #{tpu_custom_call.1} parent=1 // pred_check_branch
      %130 = sbr.rel (0) target = $region61
    $region60: #{tpu_custom_call.1} parent=1 // pred_region
      %131 = dma.done [#allocation12], 1024
    $region61: #{tpu_custom_call.1} parent=1 // pred_fallthru
      _
    // Predicated region
    $region62: #{tpu_custom_call.1} parent=1 // pred_check
      _
    $region63: #{tpu_custom_call.1} parent=1 // pred_check_branch
      %133 = sbr.rel (0) target = $region65
    $region64: #{tpu_custom_call.1} parent=1 // pred_region
      %134 = dma.done [#allocation15], 1024
    $region65: #{tpu_custom_call.1} parent=1 // pred_fallthru
      _
    %v136 = vld [vmem:[#allocation2] sm:$0xff]
    %v137 = vpack.c.bf16 %v136, %v136
    %v138 = vld [vmem:[#allocation5] sm:$0xff]
    %v139 = vld [vmem:[#allocation7] sm:$0xff]
    %v140 = vld [vmem:[#allocation7 + $0x8] sm:$0xff]
    %v141 = vld [vmem:[#allocation7 + $0x10] sm:$0xff]
    %v142 = vld [vmem:[#allocation7 + $0x18] sm:$0xff]
    %v143 = vld [vmem:[#allocation7 + $0x20] sm:$0xff]
    %v144 = vld [vmem:[#allocation7 + $0x28] sm:$0xff]
    %v145 = vld [vmem:[#allocation7 + $0x30] sm:$0xff]
    %v146 = vld [vmem:[#allocation7 + $0x38] sm:$0xff]
    %v147 = vld [vmem:[#allocation7 + $0x40] sm:$0xff]
    %v148 = vld [vmem:[#allocation7 + $0x48] sm:$0xff]
    %v149 = vld [vmem:[#allocation7 + $0x50] sm:$0xff]
    %v150 = vld [vmem:[#allocation7 + $0x58] sm:$0xff]
    %v151 = vld [vmem:[#allocation7 + $0x60] sm:$0xff]
    %v152 = vld [vmem:[#allocation7 + $0x68] sm:$0xff]
    %v153 = vld [vmem:[#allocation7 + $0x70] sm:$0xff]
    %v154 = vld [vmem:[#allocation7 + $0x78] sm:$0xff]
    %v155 = vld [vmem:[#allocation7 + $0x80] sm:$0xff]
    %v156 = vld [vmem:[#allocation7 + $0x88] sm:$0xff]
    %v157 = vld [vmem:[#allocation7 + $0x90] sm:$0xff]
    %v158 = vld [vmem:[#allocation7 + $0x98] sm:$0xff]
    %v159 = vld [vmem:[#allocation7 + $0xa0] sm:$0xff]
    %v160 = vld [vmem:[#allocation7 + $0xa8] sm:$0xff]
    %v161 = vld [vmem:[#allocation7 + $0xb0] sm:$0xff]
    %v162 = vld [vmem:[#allocation7 + $0xb8] sm:$0xff]
    %v163 = vld [vmem:[#allocation7 + $0xc0] sm:$0xff]
    %v164 = vld [vmem:[#allocation7 + $0xc8] sm:$0xff]
    %v165 = vld [vmem:[#allocation7 + $0xd0] sm:$0xff]
    %v166 = vld [vmem:[#allocation7 + $0xd8] sm:$0xff]
    %v167 = vld [vmem:[#allocation7 + $0xe0] sm:$0xff]
    %v168 = vld [vmem:[#allocation7 + $0xe8] sm:$0xff]
    %v169 = vld [vmem:[#allocation7 + $0xf0] sm:$0xff]
    %v170 = vld [vmem:[#allocation7 + $0xf8] sm:$0xff]
    %v172 = vlaneseq
    %v173 = vshrl.u32 %v172, 7
    %v174 = vsub.s32 0, %v173
    %v175 = vrot.slane %v138, %v174
    %v176 = vlaneseq
    %v177 = vshrl.u32 %v176, 7
    %v178 = vsub.s32 1, %v177
    %v179 = vrot.slane %v138, %v178
    %v180 = vlaneseq
    %v181 = vshrl.u32 %v180, 7
    %v182 = vsub.s32 2, %v181
    %v183 = vrot.slane %v138, %v182
    %v184 = vlaneseq
    %v185 = vshrl.u32 %v184, 7
    %v186 = vsub.s32 3, %v185
    %v187 = vrot.slane %v138, %v186
    %v188 = vlaneseq
    %v189 = vshrl.u32 %v188, 7
    %v190 = vsub.s32 4, %v189
    %v191 = vrot.slane %v138, %v190
    %v192 = vlaneseq
    %v193 = vshrl.u32 %v192, 7
    %v194 = vsub.s32 5, %v193
    %v195 = vrot.slane %v138, %v194
    %v196 = vlaneseq
    %v197 = vshrl.u32 %v196, 7
    %v198 = vsub.s32 6, %v197
    %v199 = vrot.slane %v138, %v198
    %v200 = vlaneseq
    %v201 = vshrl.u32 %v200, 7
    %v202 = vsub.s32 7, %v201
    %v203 = vrot.slane %v138, %v202
    %v244 = vunpack.c.l.b16 %v139
    %v245 = vunpack.c.h.b16 %v139
    %v246 = vunpack.c.l.b16 %v140
    %v247 = vunpack.c.h.b16 %v140
    %v248 = vunpack.c.l.b16 %v141
    %v249 = vunpack.c.h.b16 %v141
    %v250 = vunpack.c.l.b16 %v142
    %v251 = vunpack.c.h.b16 %v142
    %v252 = vunpack.c.l.b16 %v143
    %v253 = vunpack.c.h.b16 %v143
    %v254 = vunpack.c.l.b16 %v144
    %v255 = vunpack.c.h.b16 %v144
    %v256 = vunpack.c.l.b16 %v145
    %v257 = vunpack.c.h.b16 %v145
    %v258 = vunpack.c.l.b16 %v146
    %v259 = vunpack.c.h.b16 %v146
    %v260 = vunpack.c.l.b16 %v147
    %v261 = vunpack.c.h.b16 %v147
    %v262 = vunpack.c.l.b16 %v148
    %v263 = vunpack.c.h.b16 %v148
    %v264 = vunpack.c.l.b16 %v149
    %v265 = vunpack.c.h.b16 %v149
    %v266 = vunpack.c.l.b16 %v150
    %v267 = vunpack.c.h.b16 %v150
    %v268 = vunpack.c.l.b16 %v151
    %v269 = vunpack.c.h.b16 %v151
    %v270 = vunpack.c.l.b16 %v152
    %v271 = vunpack.c.h.b16 %v152
    %v272 = vunpack.c.l.b16 %v153
    %v273 = vunpack.c.h.b16 %v153
    %v274 = vunpack.c.l.b16 %v154
    %v275 = vunpack.c.h.b16 %v154
    %v276 = vunpack.c.l.b16 %v155
    %v277 = vunpack.c.h.b16 %v155
    %v278 = vunpack.c.l.b16 %v156
    %v279 = vunpack.c.h.b16 %v156
    %v280 = vunpack.c.l.b16 %v157
    %v281 = vunpack.c.h.b16 %v157
    %v282 = vunpack.c.l.b16 %v158
    %v283 = vunpack.c.h.b16 %v158
    %v284 = vunpack.c.l.b16 %v159
    %v285 = vunpack.c.h.b16 %v159
    %v286 = vunpack.c.l.b16 %v160
    %v287 = vunpack.c.h.b16 %v160
    %v288 = vunpack.c.l.b16 %v161
    %v289 = vunpack.c.h.b16 %v161
    %v290 = vunpack.c.l.b16 %v162
    %v291 = vunpack.c.h.b16 %v162
    %v292 = vunpack.c.l.b16 %v163
    %v293 = vunpack.c.h.b16 %v163
    %v294 = vunpack.c.l.b16 %v164
    %v295 = vunpack.c.h.b16 %v164
    %v296 = vunpack.c.l.b16 %v165
    %v297 = vunpack.c.h.b16 %v165
    %v298 = vunpack.c.l.b16 %v166
    %v299 = vunpack.c.h.b16 %v166
    %v300 = vunpack.c.l.b16 %v167
    %v301 = vunpack.c.h.b16 %v167
    %v302 = vunpack.c.l.b16 %v168
    %v303 = vunpack.c.h.b16 %v168
    %v304 = vunpack.c.l.b16 %v169
    %v305 = vunpack.c.h.b16 %v169
    %v306 = vunpack.c.l.b16 %v170
    %v307 = vunpack.c.h.b16 %v170
    %v308 = vpack.c.b16 %v252, %v244
    %v309 = vpack.c.b16 %v253, %v245
    %v310 = vpack.c.b16 %v254, %v246
    %v311 = vpack.c.b16 %v255, %v247
    %v312 = vpack.c.b16 %v256, %v248
    %v313 = vpack.c.b16 %v257, %v249
    %v314 = vpack.c.b16 %v258, %v250
    %v315 = vpack.c.b16 %v259, %v251
    %v316 = vpack.c.b16 %v268, %v260
    %v317 = vpack.c.b16 %v269, %v261
    %v318 = vpack.c.b16 %v270, %v262
    %v319 = vpack.c.b16 %v271, %v263
    %v320 = vpack.c.b16 %v272, %v264
    %v321 = vpack.c.b16 %v273, %v265
    %v322 = vpack.c.b16 %v274, %v266
    %v323 = vpack.c.b16 %v275, %v267
    %v324 = vpack.c.b16 %v284, %v276
    %v325 = vpack.c.b16 %v285, %v277
    %v326 = vpack.c.b16 %v286, %v278
    %v327 = vpack.c.b16 %v287, %v279
    %v328 = vpack.c.b16 %v288, %v280
    %v329 = vpack.c.b16 %v289, %v281
    %v330 = vpack.c.b16 %v290, %v282
    %v331 = vpack.c.b16 %v291, %v283
    %v332 = vpack.c.b16 %v300, %v292
    %v333 = vpack.c.b16 %v301, %v293
    %v334 = vpack.c.b16 %v302, %v294
    %v335 = vpack.c.b16 %v303, %v295
    %v336 = vpack.c.b16 %v304, %v296
    %v337 = vpack.c.b16 %v305, %v297
    %v338 = vpack.c.b16 %v306, %v298
    %v339 = vpack.c.b16 %v307, %v299
    %vm372 = vcmask 523264
    %v374 = vsel %vm372, %v137, 0
    %376 = vmatprep.subr.bf16.mxu0 0
    %377 = vmatpush1.bf16.msra.mxu0 0
    %378 = vmatprep.subr.bf16.mxu0 0
    %379 = vmatpush1.bf16.msra.mxu0 0
    %380 = vmatprep.subr.bf16.mxu0 0
    %381 = vmatpush1.bf16.msra.mxu0 0
    %382 = vmatprep.subr.bf16.mxu0 0
    %383 = vmatpush1.bf16.msra.mxu0 0
    %384 = vmatprep.subr.bf16.mxu0 %v333
    %385 = vmatpush1.bf16.msra.mxu0 %v332
    %386 = vmatprep.subr.bf16.mxu0 %v325
    %387 = vmatpush1.bf16.msra.mxu0 %v324
    %388 = vmatprep.subr.bf16.mxu0 %v317
    %389 = vmatpush1.bf16.msra.mxu0 %v316
    %390 = vmatprep.subr.bf16.mxu0 %v309
    %391 = vmatpush1.bf16.msra.mxu0 %v308
    %392 = vmatprep.subr.bf16.mxu0 0
    %393 = vmatpush2.bf16.msra.mxu0 0
    %394 = vmatprep.subr.bf16.mxu0 0
    %395 = vmatpush2.bf16.msra.mxu0 0
    %396 = vmatprep.subr.bf16.mxu0 0
    %397 = vmatpush2.bf16.msra.mxu0 0
    %398 = vmatprep.subr.bf16.mxu0 0
    %399 = vmatpush2.bf16.msra.mxu0 0
    %400 = vmatprep.subr.bf16.mxu0 0
    %401 = vmatpush2.bf16.msra.mxu0 0
    %402 = vmatprep.subr.bf16.mxu0 0
    %403 = vmatpush2.bf16.msra.mxu0 0
    %404 = vmatprep.subr.bf16.mxu0 0
    %405 = vmatpush2.bf16.msra.mxu0 0
    %406 = vmatprep.subr.bf16.mxu0 0
    %407 = vmatpush2.bf16.msra.mxu0 0
    %408 = vmatprep.mubr.bf16.mxu0 0
    %409 = vmatmul.mubr.bf16.gmra.mxu0 %v374
    %v410 = vpop.f32.mrf.mxu0
    %v411 = vadd.f32 %v175, %v410
    %v412 = vpop.f32.mrf.mxu0
    %v413 = vadd.f32 %v179, %v412
    %v414 = vpop.f32.mrf.mxu0
    %v415 = vpop.f32.mrf.mxu0
    %416 = vdwg.mxu0
    %417 = vmatprep.subr.bf16.mxu0 0
    %418 = vmatpush1.bf16.msra.mxu0 0
    %419 = vmatprep.subr.bf16.mxu0 0
    %420 = vmatpush1.bf16.msra.mxu0 0
    %421 = vmatprep.subr.bf16.mxu0 0
    %422 = vmatpush1.bf16.msra.mxu0 0
    %423 = vmatprep.subr.bf16.mxu0 0
    %424 = vmatpush1.bf16.msra.mxu0 0
    %425 = vmatprep.subr.bf16.mxu0 %v335
    %426 = vmatpush1.bf16.msra.mxu0 %v334
    %427 = vmatprep.subr.bf16.mxu0 %v327
    %428 = vmatpush1.bf16.msra.mxu0 %v326
    %429 = vmatprep.subr.bf16.mxu0 %v319
    %430 = vmatpush1.bf16.msra.mxu0 %v318
    %431 = vmatprep.subr.bf16.mxu0 %v311
    %432 = vmatpush1.bf16.msra.mxu0 %v310
    %433 = vmatprep.subr.bf16.mxu0 0
    %434 = vmatpush2.bf16.msra.mxu0 0
    %435 = vmatprep.subr.bf16.mxu0 0
    %436 = vmatpush2.bf16.msra.mxu0 0
    %437 = vmatprep.subr.bf16.mxu0 0
    %438 = vmatpush2.bf16.msra.mxu0 0
    %439 = vmatprep.subr.bf16.mxu0 0
    %440 = vmatpush2.bf16.msra.mxu0 0
    %441 = vmatprep.subr.bf16.mxu0 0
    %442 = vmatpush2.bf16.msra.mxu0 0
    %443 = vmatprep.subr.bf16.mxu0 0
    %444 = vmatpush2.bf16.msra.mxu0 0
    %445 = vmatprep.subr.bf16.mxu0 0
    %446 = vmatpush2.bf16.msra.mxu0 0
    %447 = vmatprep.subr.bf16.mxu0 0
    %448 = vmatpush2.bf16.msra.mxu0 0
    %449 = vmatprep.mubr.bf16.mxu0 0
    %450 = vmatmul.mubr.bf16.gmra.mxu0 %v374
    %v451 = vpop.f32.mrf.mxu0
    %v452 = vadd.f32 %v183, %v451
    %v453 = vpop.f32.mrf.mxu0
    %v454 = vadd.f32 %v187, %v453
    %v455 = vpop.f32.mrf.mxu0
    %v456 = vpop.f32.mrf.mxu0
    %457 = vdwg.mxu0
    %458 = vmatprep.subr.bf16.mxu0 0
    %459 = vmatpush1.bf16.msra.mxu0 0
    %460 = vmatprep.subr.bf16.mxu0 0
    %461 = vmatpush1.bf16.msra.mxu0 0
    %462 = vmatprep.subr.bf16.mxu0 0
    %463 = vmatpush1.bf16.msra.mxu0 0
    %464 = vmatprep.subr.bf16.mxu0 0
    %465 = vmatpush1.bf16.msra.mxu0 0
    %466 = vmatprep.subr.bf16.mxu0 %v337
    %467 = vmatpush1.bf16.msra.mxu0 %v336
    %468 = vmatprep.subr.bf16.mxu0 %v329
    %469 = vmatpush1.bf16.msra.mxu0 %v328
    %470 = vmatprep.subr.bf16.mxu0 %v321
    %471 = vmatpush1.bf16.msra.mxu0 %v320
    %472 = vmatprep.subr.bf16.mxu0 %v313
    %473 = vmatpush1.bf16.msra.mxu0 %v312
    %474 = vmatprep.subr.bf16.mxu0 0
    %475 = vmatpush2.bf16.msra.mxu0 0
    %476 = vmatprep.subr.bf16.mxu0 0
    %477 = vmatpush2.bf16.msra.mxu0 0
    %478 = vmatprep.subr.bf16.mxu0 0
    %479 = vmatpush2.bf16.msra.mxu0 0
    %480 = vmatprep.subr.bf16.mxu0 0
    %481 = vmatpush2.bf16.msra.mxu0 0
    %482 = vmatprep.subr.bf16.mxu0 0
    %483 = vmatpush2.bf16.msra.mxu0 0
    %484 = vmatprep.subr.bf16.mxu0 0
    %485 = vmatpush2.bf16.msra.mxu0 0
    %486 = vmatprep.subr.bf16.mxu0 0
    %487 = vmatpush2.bf16.msra.mxu0 0
    %488 = vmatprep.subr.bf16.mxu0 0
    %489 = vmatpush2.bf16.msra.mxu0 0
    %490 = vmatprep.mubr.bf16.mxu0 0
    %491 = vmatmul.mubr.bf16.gmra.mxu0 %v374
    %v492 = vpop.f32.mrf.mxu0
    %v493 = vadd.f32 %v191, %v492
    %v494 = vpop.f32.mrf.mxu0
    %v495 = vadd.f32 %v195, %v494
    %v496 = vpop.f32.mrf.mxu0
    %v497 = vpop.f32.mrf.mxu0
    %498 = vdwg.mxu0
    %499 = vmatprep.subr.bf16.mxu0 0
    %500 = vmatpush1.bf16.msra.mxu0 0
    %501 = vmatprep.subr.bf16.mxu0 0
    %502 = vmatpush1.bf16.msra.mxu0 0
    %503 = vmatprep.subr.bf16.mxu0 0
    %504 = vmatpush1.bf16.msra.mxu0 0
    %505 = vmatprep.subr.bf16.mxu0 0
    %506 = vmatpush1.bf16.msra.mxu0 0
    %507 = vmatprep.subr.bf16.mxu0 %v339
    %508 = vmatpush1.bf16.msra.mxu0 %v338
    %509 = vmatprep.subr.bf16.mxu0 %v331
    %510 = vmatpush1.bf16.msra.mxu0 %v330
    %511 = vmatprep.subr.bf16.mxu0 %v323
    %512 = vmatpush1.bf16.msra.mxu0 %v322
    %513 = vmatprep.subr.bf16.mxu0 %v315
    %514 = vmatpush1.bf16.msra.mxu0 %v314
    %515 = vmatprep.subr.bf16.mxu0 0
    %516 = vmatpush2.bf16.msra.mxu0 0
    %517 = vmatprep.subr.bf16.mxu0 0
    %518 = vmatpush2.bf16.msra.mxu0 0
    %519 = vmatprep.subr.bf16.mxu0 0
    %520 = vmatpush2.bf16.msra.mxu0 0
    %521 = vmatprep.subr.bf16.mxu0 0
    %522 = vmatpush2.bf16.msra.mxu0 0
    %523 = vmatprep.subr.bf16.mxu0 0
    %524 = vmatpush2.bf16.msra.mxu0 0
    %525 = vmatprep.subr.bf16.mxu0 0
    %526 = vmatpush2.bf16.msra.mxu0 0
    %527 = vmatprep.subr.bf16.mxu0 0
    %528 = vmatpush2.bf16.msra.mxu0 0
    %529 = vmatprep.subr.bf16.mxu0 0
    %530 = vmatpush2.bf16.msra.mxu0 0
    %531 = vmatprep.mubr.bf16.mxu0 0
    %532 = vmatmul.mubr.bf16.gmra.mxu0 %v374
    %v533 = vpop.f32.mrf.mxu0
    %v534 = vadd.f32 %v199, %v533
    %v535 = vpop.f32.mrf.mxu0
    %v536 = vadd.f32 %v203, %v535
    %v537 = vpop.f32.mrf.mxu0
    %v538 = vpop.f32.mrf.mxu0
    %539 = vdwg.mxu0
    %v540 = vmax.f32 %v411, 0.0
    %v541 = vmax.f32 %v413, 0.0
    %v542 = vmax.f32 %v452, 0.0
    %v543 = vmax.f32 %v454, 0.0
    %v544 = vmax.f32 %v493, 0.0
    %v545 = vmax.f32 %v495, 0.0
    %v546 = vmax.f32 %v534, 0.0
    %v547 = vmax.f32 %v536, 0.0
    %v548 = vpack.c.bf16 %v540, %v540
    %v549 = vpack.c.bf16 %v541, %v541
    %v550 = vpack.c.bf16 %v542, %v542
    %v551 = vpack.c.bf16 %v543, %v543
    %v552 = vpack.c.bf16 %v544, %v544
    %v553 = vpack.c.bf16 %v545, %v545
    %v554 = vpack.c.bf16 %v546, %v546
    %v555 = vpack.c.bf16 %v547, %v547
    %v556 = vld [vmem:[#allocation5 + $0x8] sm:$0xf]
    %v557 = vld [vmem:[#allocation8] sm:$0xff]
    %v558 = vld [vmem:[#allocation8 + $0x8] sm:$0xff]
    %v559 = vld [vmem:[#allocation8 + $0x10] sm:$0xff]
    %v560 = vld [vmem:[#allocation8 + $0x18] sm:$0xff]
    %v561 = vld [vmem:[#allocation8 + $0x20] sm:$0xff]
    %v562 = vld [vmem:[#allocation8 + $0x28] sm:$0xff]
    %v563 = vld [vmem:[#allocation8 + $0x30] sm:$0xff]
    %v564 = vld [vmem:[#allocation8 + $0x38] sm:$0xff]
    %v565 = vld [vmem:[#allocation8 + $0x40] sm:$0xff]
    %v566 = vld [vmem:[#allocation8 + $0x48] sm:$0xff]
    %v567 = vld [vmem:[#allocation8 + $0x50] sm:$0xff]
    %v568 = vld [vmem:[#allocation8 + $0x58] sm:$0xff]
    %v569 = vld [vmem:[#allocation8 + $0x60] sm:$0xff]
    %v570 = vld [vmem:[#allocation8 + $0x68] sm:$0xff]
    %v571 = vld [vmem:[#allocation8 + $0x70] sm:$0xff]
    %v572 = vld [vmem:[#allocation8 + $0x78] sm:$0xff]
    %v573 = vld [vmem:[#allocation8 + $0x80] sm:$0xff]
    %v574 = vld [vmem:[#allocation8 + $0x88] sm:$0xff]
    %v575 = vld [vmem:[#allocation8 + $0x90] sm:$0xff]
    %v576 = vld [vmem:[#allocation8 + $0x98] sm:$0xff]
    %v577 = vld [vmem:[#allocation8 + $0xa0] sm:$0xff]
    %v578 = vld [vmem:[#allocation8 + $0xa8] sm:$0xff]
    %v579 = vld [vmem:[#allocation8 + $0xb0] sm:$0xff]
    %v580 = vld [vmem:[#allocation8 + $0xb8] sm:$0xff]
    %v581 = vld [vmem:[#allocation8 + $0xc0] sm:$0xff]
    %v582 = vld [vmem:[#allocation8 + $0xc8] sm:$0xff]
    %v583 = vld [vmem:[#allocation8 + $0xd0] sm:$0xff]
    %v584 = vld [vmem:[#allocation8 + $0xd8] sm:$0xff]
    %v585 = vld [vmem:[#allocation8 + $0xe0] sm:$0xff]
    %v586 = vld [vmem:[#allocation8 + $0xe8] sm:$0xff]
    %v587 = vld [vmem:[#allocation8 + $0xf0] sm:$0xff]
    %v588 = vld [vmem:[#allocation8 + $0xf8] sm:$0xff]
    %v589 = vld [vmem:[#allocation8 + $0x100] sm:$0xff]
    %v590 = vld [vmem:[#allocation8 + $0x108] sm:$0xff]
    %v591 = vld [vmem:[#allocation8 + $0x110] sm:$0xff]
    %v592 = vld [vmem:[#allocation8 + $0x118] sm:$0xff]
    %v593 = vld [vmem:[#allocation8 + $0x120] sm:$0xff]
    %v594 = vld [vmem:[#allocation8 + $0x128] sm:$0xff]
    %v595 = vld [vmem:[#allocation8 + $0x130] sm:$0xff]
    %v596 = vld [vmem:[#allocation8 + $0x138] sm:$0xff]
    %v597 = vld [vmem:[#allocation8 + $0x140] sm:$0xff]
    %v598 = vld [vmem:[#allocation8 + $0x148] sm:$0xff]
    %v599 = vld [vmem:[#allocation8 + $0x150] sm:$0xff]
    %v600 = vld [vmem:[#allocation8 + $0x158] sm:$0xff]
    %v601 = vld [vmem:[#allocation8 + $0x160] sm:$0xff]
    %v602 = vld [vmem:[#allocation8 + $0x168] sm:$0xff]
    %v603 = vld [vmem:[#allocation8 + $0x170] sm:$0xff]
    %v604 = vld [vmem:[#allocation8 + $0x178] sm:$0xff]
    %v605 = vld [vmem:[#allocation8 + $0x180] sm:$0xff]
    %v606 = vld [vmem:[#allocation8 + $0x188] sm:$0xff]
    %v607 = vld [vmem:[#allocation8 + $0x190] sm:$0xff]
    %v608 = vld [vmem:[#allocation8 + $0x198] sm:$0xff]
    %v609 = vld [vmem:[#allocation8 + $0x1a0] sm:$0xff]
    %v610 = vld [vmem:[#allocation8 + $0x1a8] sm:$0xff]
    %v611 = vld [vmem:[#allocation8 + $0x1b0] sm:$0xff]
    %v612 = vld [vmem:[#allocation8 + $0x1b8] sm:$0xff]
    %v613 = vld [vmem:[#allocation8 + $0x1c0] sm:$0xff]
    %v614 = vld [vmem:[#allocation8 + $0x1c8] sm:$0xff]
    %v615 = vld [vmem:[#allocation8 + $0x1d0] sm:$0xff]
    %v616 = vld [vmem:[#allocation8 + $0x1d8] sm:$0xff]
    %v617 = vld [vmem:[#allocation8 + $0x1e0] sm:$0xff]
    %v618 = vld [vmem:[#allocation8 + $0x1e8] sm:$0xff]
    %v619 = vld [vmem:[#allocation8 + $0x1f0] sm:$0xff]
    %v620 = vld [vmem:[#allocation8 + $0x1f8] sm:$0xff]
    %v621 = vld [vmem:[#allocation8 + $0x200] sm:$0xff]
    %v622 = vld [vmem:[#allocation8 + $0x208] sm:$0xff]
    %v623 = vld [vmem:[#allocation8 + $0x210] sm:$0xff]
    %v624 = vld [vmem:[#allocation8 + $0x218] sm:$0xff]
    %v625 = vld [vmem:[#allocation8 + $0x220] sm:$0xff]
    %v626 = vld [vmem:[#allocation8 + $0x228] sm:$0xff]
    %v627 = vld [vmem:[#allocation8 + $0x230] sm:$0xff]
    %v628 = vld [vmem:[#allocation8 + $0x238] sm:$0xff]
    %v629 = vld [vmem:[#allocation8 + $0x240] sm:$0xff]
    %v630 = vld [vmem:[#allocation8 + $0x248] sm:$0xff]
    %v631 = vld [vmem:[#allocation8 + $0x250] sm:$0xff]
    %v632 = vld [vmem:[#allocation8 + $0x258] sm:$0xff]
    %v633 = vld [vmem:[#allocation8 + $0x260] sm:$0xff]
    %v634 = vld [vmem:[#allocation8 + $0x268] sm:$0xff]
    %v635 = vld [vmem:[#allocation8 + $0x270] sm:$0xff]
    %v636 = vld [vmem:[#allocation8 + $0x278] sm:$0xff]
    %v637 = vld [vmem:[#allocation8 + $0x280] sm:$0xff]
    %v638 = vld [vmem:[#allocation8 + $0x288] sm:$0xff]
    %v639 = vld [vmem:[#allocation8 + $0x290] sm:$0xff]
    %v640 = vld [vmem:[#allocation8 + $0x298] sm:$0xff]
    %v641 = vld [vmem:[#allocation8 + $0x2a0] sm:$0xff]
    %v642 = vld [vmem:[#allocation8 + $0x2a8] sm:$0xff]
    %v643 = vld [vmem:[#allocation8 + $0x2b0] sm:$0xff]
    %v644 = vld [vmem:[#allocation8 + $0x2b8] sm:$0xff]
    %v645 = vld [vmem:[#allocation8 + $0x2c0] sm:$0xff]
    %v646 = vld [vmem:[#allocation8 + $0x2c8] sm:$0xff]
    %v647 = vld [vmem:[#allocation8 + $0x2d0] sm:$0xff]
    %v648 = vld [vmem:[#allocation8 + $0x2d8] sm:$0xff]
    %v649 = vld [vmem:[#allocation8 + $0x2e0] sm:$0xff]
    %v650 = vld [vmem:[#allocation8 + $0x2e8] sm:$0xff]
    %v651 = vld [vmem:[#allocation8 + $0x2f0] sm:$0xff]
    %v652 = vld [vmem:[#allocation8 + $0x2f8] sm:$0xff]
    %v653 = vld [vmem:[#allocation8 + $0x300] sm:$0xff]
    %v654 = vld [vmem:[#allocation8 + $0x308] sm:$0xff]
    %v655 = vld [vmem:[#allocation8 + $0x310] sm:$0xff]
    %v656 = vld [vmem:[#allocation8 + $0x318] sm:$0xff]
    %v657 = vld [vmem:[#allocation8 + $0x320] sm:$0xff]
    %v658 = vld [vmem:[#allocation8 + $0x328] sm:$0xff]
    %v659 = vld [vmem:[#allocation8 + $0x330] sm:$0xff]
    %v660 = vld [vmem:[#allocation8 + $0x338] sm:$0xff]
    %v661 = vld [vmem:[#allocation8 + $0x340] sm:$0xff]
    %v662 = vld [vmem:[#allocation8 + $0x348] sm:$0xff]
    %v663 = vld [vmem:[#allocation8 + $0x350] sm:$0xff]
    %v664 = vld [vmem:[#allocation8 + $0x358] sm:$0xff]
    %v665 = vld [vmem:[#allocation8 + $0x360] sm:$0xff]
    %v666 = vld [vmem:[#allocation8 + $0x368] sm:$0xff]
    %v667 = vld [vmem:[#allocation8 + $0x370] sm:$0xff]
    %v668 = vld [vmem:[#allocation8 + $0x378] sm:$0xff]
    %v669 = vld [vmem:[#allocation8 + $0x380] sm:$0xff]
    %v670 = vld [vmem:[#allocation8 + $0x388] sm:$0xff]
    %v671 = vld [vmem:[#allocation8 + $0x390] sm:$0xff]
    %v672 = vld [vmem:[#allocation8 + $0x398] sm:$0xff]
    %v673 = vld [vmem:[#allocation8 + $0x3a0] sm:$0xff]
    %v674 = vld [vmem:[#allocation8 + $0x3a8] sm:$0xff]
    %v675 = vld [vmem:[#allocation8 + $0x3b0] sm:$0xff]
    %v676 = vld [vmem:[#allocation8 + $0x3b8] sm:$0xff]
    %v677 = vld [vmem:[#allocation8 + $0x3c0] sm:$0xff]
    %v678 = vld [vmem:[#allocation8 + $0x3c8] sm:$0xff]
    %v679 = vld [vmem:[#allocation8 + $0x3d0] sm:$0xff]
    %v680 = vld [vmem:[#allocation8 + $0x3d8] sm:$0xff]
    %v681 = vld [vmem:[#allocation8 + $0x3e0] sm:$0xff]
    %v682 = vld [vmem:[#allocation8 + $0x3e8] sm:$0xff]
    %v683 = vld [vmem:[#allocation8 + $0x3f0] sm:$0xff]
    %v684 = vld [vmem:[#allocation8 + $0x3f8] sm:$0xff]
    %v685 = vld [vmem:[#allocation8 + $0x400] sm:$0xff]
    %v686 = vld [vmem:[#allocation8 + $0x408] sm:$0xff]
    %v687 = vld [vmem:[#allocation8 + $0x410] sm:$0xff]
    %v688 = vld [vmem:[#allocation8 + $0x418] sm:$0xff]
    %v689 = vld [vmem:[#allocation8 + $0x420] sm:$0xff]
    %v690 = vld [vmem:[#allocation8 + $0x428] sm:$0xff]
    %v691 = vld [vmem:[#allocation8 + $0x430] sm:$0xff]
    %v692 = vld [vmem:[#allocation8 + $0x438] sm:$0xff]
    %v693 = vld [vmem:[#allocation8 + $0x440] sm:$0xff]
    %v694 = vld [vmem:[#allocation8 + $0x448] sm:$0xff]
    %v695 = vld [vmem:[#allocation8 + $0x450] sm:$0xff]
    %v696 = vld [vmem:[#allocation8 + $0x458] sm:$0xff]
    %v697 = vld [vmem:[#allocation8 + $0x460] sm:$0xff]
    %v698 = vld [vmem:[#allocation8 + $0x468] sm:$0xff]
    %v699 = vld [vmem:[#allocation8 + $0x470] sm:$0xff]
    %v700 = vld [vmem:[#allocation8 + $0x478] sm:$0xff]
    %v701 = vld [vmem:[#allocation8 + $0x480] sm:$0xff]
    %v702 = vld [vmem:[#allocation8 + $0x488] sm:$0xff]
    %v703 = vld [vmem:[#allocation8 + $0x490] sm:$0xff]
    %v704 = vld [vmem:[#allocation8 + $0x498] sm:$0xff]
    %v705 = vld [vmem:[#allocation8 + $0x4a0] sm:$0xff]
    %v706 = vld [vmem:[#allocation8 + $0x4a8] sm:$0xff]
    %v707 = vld [vmem:[#allocation8 + $0x4b0] sm:$0xff]
    %v708 = vld [vmem:[#allocation8 + $0x4b8] sm:$0xff]
    %v709 = vld [vmem:[#allocation8 + $0x4c0] sm:$0xff]
    %v710 = vld [vmem:[#allocation8 + $0x4c8] sm:$0xff]
    %v711 = vld [vmem:[#allocation8 + $0x4d0] sm:$0xff]
    %v712 = vld [vmem:[#allocation8 + $0x4d8] sm:$0xff]
    %v713 = vld [vmem:[#allocation8 + $0x4e0] sm:$0xff]
    %v714 = vld [vmem:[#allocation8 + $0x4e8] sm:$0xff]
    %v715 = vld [vmem:[#allocation8 + $0x4f0] sm:$0xff]
    %v716 = vld [vmem:[#allocation8 + $0x4f8] sm:$0xff]
    %v717 = vld [vmem:[#allocation8 + $0x500] sm:$0xff]
    %v718 = vld [vmem:[#allocation8 + $0x508] sm:$0xff]
    %v719 = vld [vmem:[#allocation8 + $0x510] sm:$0xff]
    %v720 = vld [vmem:[#allocation8 + $0x518] sm:$0xff]
    %v721 = vld [vmem:[#allocation8 + $0x520] sm:$0xff]
    %v722 = vld [vmem:[#allocation8 + $0x528] sm:$0xff]
    %v723 = vld [vmem:[#allocation8 + $0x530] sm:$0xff]
    %v724 = vld [vmem:[#allocation8 + $0x538] sm:$0xff]
    %v725 = vld [vmem:[#allocation8 + $0x540] sm:$0xff]
    %v726 = vld [vmem:[#allocation8 + $0x548] sm:$0xff]
    %v727 = vld [vmem:[#allocation8 + $0x550] sm:$0xff]
    %v728 = vld [vmem:[#allocation8 + $0x558] sm:$0xff]
    %v729 = vld [vmem:[#allocation8 + $0x560] sm:$0xff]
    %v730 = vld [vmem:[#allocation8 + $0x568] sm:$0xff]
    %v731 = vld [vmem:[#allocation8 + $0x570] sm:$0xff]
    %v732 = vld [vmem:[#allocation8 + $0x578] sm:$0xff]
    %v733 = vld [vmem:[#allocation8 + $0x580] sm:$0xff]
    %v734 = vld [vmem:[#allocation8 + $0x588] sm:$0xff]
    %v735 = vld [vmem:[#allocation8 + $0x590] sm:$0xff]
    %v736 = vld [vmem:[#allocation8 + $0x598] sm:$0xff]
    %v737 = vld [vmem:[#allocation8 + $0x5a0] sm:$0xff]
    %v738 = vld [vmem:[#allocation8 + $0x5a8] sm:$0xff]
    %v739 = vld [vmem:[#allocation8 + $0x5b0] sm:$0xff]
    %v740 = vld [vmem:[#allocation8 + $0x5b8] sm:$0xff]
    %v741 = vld [vmem:[#allocation8 + $0x5c0] sm:$0xff]
    %v742 = vld [vmem:[#allocation8 + $0x5c8] sm:$0xff]
    %v743 = vld [vmem:[#allocation8 + $0x5d0] sm:$0xff]
    %v744 = vld [vmem:[#allocation8 + $0x5d8] sm:$0xff]
    %v745 = vld [vmem:[#allocation8 + $0x5e0] sm:$0xff]
    %v746 = vld [vmem:[#allocation8 + $0x5e8] sm:$0xff]
    %v747 = vld [vmem:[#allocation8 + $0x5f0] sm:$0xff]
    %v748 = vld [vmem:[#allocation8 + $0x5f8] sm:$0xff]
    %v749 = vld [vmem:[#allocation8 + $0x600] sm:$0xff]
    %v750 = vld [vmem:[#allocation8 + $0x608] sm:$0xff]
    %v751 = vld [vmem:[#allocation8 + $0x610] sm:$0xff]
    %v752 = vld [vmem:[#allocation8 + $0x618] sm:$0xff]
    %v753 = vld [vmem:[#allocation8 + $0x620] sm:$0xff]
    %v754 = vld [vmem:[#allocation8 + $0x628] sm:$0xff]
    %v755 = vld [vmem:[#allocation8 + $0x630] sm:$0xff]
    %v756 = vld [vmem:[#allocation8 + $0x638] sm:$0xff]
    %v757 = vld [vmem:[#allocation8 + $0x640] sm:$0xff]
    %v758 = vld [vmem:[#allocation8 + $0x648] sm:$0xff]
    %v759 = vld [vmem:[#allocation8 + $0x650] sm:$0xff]
    %v760 = vld [vmem:[#allocation8 + $0x658] sm:$0xff]
    %v761 = vld [vmem:[#allocation8 + $0x660] sm:$0xff]
    %v762 = vld [vmem:[#allocation8 + $0x668] sm:$0xff]
    %v763 = vld [vmem:[#allocation8 + $0x670] sm:$0xff]
    %v764 = vld [vmem:[#allocation8 + $0x678] sm:$0xff]
    %v765 = vld [vmem:[#allocation8 + $0x680] sm:$0xff]
    %v766 = vld [vmem:[#allocation8 + $0x688] sm:$0xff]
    %v767 = vld [vmem:[#allocation8 + $0x690] sm:$0xff]
    %v768 = vld [vmem:[#allocation8 + $0x698] sm:$0xff]
    %v769 = vld [vmem:[#allocation8 + $0x6a0] sm:$0xff]
    %v770 = vld [vmem:[#allocation8 + $0x6a8] sm:$0xff]
    %v771 = vld [vmem:[#allocation8 + $0x6b0] sm:$0xff]
    %v772 = vld [vmem:[#allocation8 + $0x6b8] sm:$0xff]
    %v773 = vld [vmem:[#allocation8 + $0x6c0] sm:$0xff]
    %v774 = vld [vmem:[#allocation8 + $0x6c8] sm:$0xff]
    %v775 = vld [vmem:[#allocation8 + $0x6d0] sm:$0xff]
    %v776 = vld [vmem:[#allocation8 + $0x6d8] sm:$0xff]
    %v777 = vld [vmem:[#allocation8 + $0x6e0] sm:$0xff]
    %v778 = vld [vmem:[#allocation8 + $0x6e8] sm:$0xff]
    %v779 = vld [vmem:[#allocation8 + $0x6f0] sm:$0xff]
    %v780 = vld [vmem:[#allocation8 + $0x6f8] sm:$0xff]
    %v781 = vld [vmem:[#allocation8 + $0x700] sm:$0xff]
    %v782 = vld [vmem:[#allocation8 + $0x708] sm:$0xff]
    %v783 = vld [vmem:[#allocation8 + $0x710] sm:$0xff]
    %v784 = vld [vmem:[#allocation8 + $0x718] sm:$0xff]
    %v785 = vld [vmem:[#allocation8 + $0x720] sm:$0xff]
    %v786 = vld [vmem:[#allocation8 + $0x728] sm:$0xff]
    %v787 = vld [vmem:[#allocation8 + $0x730] sm:$0xff]
    %v788 = vld [vmem:[#allocation8 + $0x738] sm:$0xff]
    %v789 = vld [vmem:[#allocation8 + $0x740] sm:$0xff]
    %v790 = vld [vmem:[#allocation8 + $0x748] sm:$0xff]
    %v791 = vld [vmem:[#allocation8 + $0x750] sm:$0xff]
    %v792 = vld [vmem:[#allocation8 + $0x758] sm:$0xff]
    %v793 = vld [vmem:[#allocation8 + $0x760] sm:$0xff]
    %v794 = vld [vmem:[#allocation8 + $0x768] sm:$0xff]
    %v795 = vld [vmem:[#allocation8 + $0x770] sm:$0xff]
    %v796 = vld [vmem:[#allocation8 + $0x778] sm:$0xff]
    %v797 = vld [vmem:[#allocation8 + $0x780] sm:$0xff]
    %v798 = vld [vmem:[#allocation8 + $0x788] sm:$0xff]
    %v799 = vld [vmem:[#allocation8 + $0x790] sm:$0xff]
    %v800 = vld [vmem:[#allocation8 + $0x798] sm:$0xff]
    %v801 = vld [vmem:[#allocation8 + $0x7a0] sm:$0xff]
    %v802 = vld [vmem:[#allocation8 + $0x7a8] sm:$0xff]
    %v803 = vld [vmem:[#allocation8 + $0x7b0] sm:$0xff]
    %v804 = vld [vmem:[#allocation8 + $0x7b8] sm:$0xff]
    %v805 = vld [vmem:[#allocation8 + $0x7c0] sm:$0xff]
    %v806 = vld [vmem:[#allocation8 + $0x7c8] sm:$0xff]
    %v807 = vld [vmem:[#allocation8 + $0x7d0] sm:$0xff]
    %v808 = vld [vmem:[#allocation8 + $0x7d8] sm:$0xff]
    %v809 = vld [vmem:[#allocation8 + $0x7e0] sm:$0xff]
    %v810 = vld [vmem:[#allocation8 + $0x7e8] sm:$0xff]
    %v811 = vld [vmem:[#allocation8 + $0x7f0] sm:$0xff]
    %v812 = vld [vmem:[#allocation8 + $0x7f8] sm:$0xff]
    %v814 = vlaneseq
    %v815 = vshrl.u32 %v814, 7
    %v816 = vsub.s32 0, %v815
    %v817 = vrot.slane %v556, %v816
    %v818 = vlaneseq
    %v819 = vshrl.u32 %v818, 7
    %v820 = vsub.s32 1, %v819
    %v821 = vrot.slane %v556, %v820
    %v822 = vlaneseq
    %v823 = vshrl.u32 %v822, 7
    %v824 = vsub.s32 2, %v823
    %v825 = vrot.slane %v556, %v824
    %v826 = vlaneseq
    %v827 = vshrl.u32 %v826, 7
    %v828 = vsub.s32 3, %v827
    %v829 = vrot.slane %v556, %v828
    %v1090 = vunpack.c.l.b16 %v557
    %v1091 = vunpack.c.h.b16 %v557
    %v1092 = vunpack.c.l.b16 %v558
    %v1093 = vunpack.c.h.b16 %v558
    %v1094 = vunpack.c.l.b16 %v559
    %v1095 = vunpack.c.h.b16 %v559
    %v1096 = vunpack.c.l.b16 %v560
    %v1097 = vunpack.c.h.b16 %v560
    %v1098 = vunpack.c.l.b16 %v561
    %v1099 = vunpack.c.h.b16 %v561
    %v1100 = vunpack.c.l.b16 %v562
    %v1101 = vunpack.c.h.b16 %v562
    %v1102 = vunpack.c.l.b16 %v563
    %v1103 = vunpack.c.h.b16 %v563
    %v1104 = vunpack.c.l.b16 %v564
    %v1105 = vunpack.c.h.b16 %v564
    %v1106 = vunpack.c.l.b16 %v565
    %v1107 = vunpack.c.h.b16 %v565
    %v1108 = vunpack.c.l.b16 %v566
    %v1109 = vunpack.c.h.b16 %v566
    %v1110 = vunpack.c.l.b16 %v567
    %v1111 = vunpack.c.h.b16 %v567
    %v1112 = vunpack.c.l.b16 %v568
    %v1113 = vunpack.c.h.b16 %v568
    %v1114 = vunpack.c.l.b16 %v569
    %v1115 = vunpack.c.h.b16 %v569
    %v1116 = vunpack.c.l.b16 %v570
    %v1117 = vunpack.c.h.b16 %v570
    %v1118 = vunpack.c.l.b16 %v571
    %v1119 = vunpack.c.h.b16 %v571
    %v1120 = vunpack.c.l.b16 %v572
    %v1121 = vunpack.c.h.b16 %v572
    %v1122 = vunpack.c.l.b16 %v573
    %v1123 = vunpack.c.h.b16 %v573
    %v1124 = vunpack.c.l.b16 %v574
    %v1125 = vunpack.c.h.b16 %v574
    %v1126 = vunpack.c.l.b16 %v575
    %v1127 = vunpack.c.h.b16 %v575
    %v1128 = vunpack.c.l.b16 %v576
    %v1129 = vunpack.c.h.b16 %v576
    %v1130 = vunpack.c.l.b16 %v577
    %v1131 = vunpack.c.h.b16 %v577
    %v1132 = vunpack.c.l.b16 %v578
    %v1133 = vunpack.c.h.b16 %v578
    %v1134 = vunpack.c.l.b16 %v579
    %v1135 = vunpack.c.h.b16 %v579
    %v1136 = vunpack.c.l.b16 %v580
    %v1137 = vunpack.c.h.b16 %v580
    %v1138 = vunpack.c.l.b16 %v581
    %v1139 = vunpack.c.h.b16 %v581
    %v1140 = vunpack.c.l.b16 %v582
    %v1141 = vunpack.c.h.b16 %v582
    %v1142 = vunpack.c.l.b16 %v583
    %v1143 = vunpack.c.h.b16 %v583
    %v1144 = vunpack.c.l.b16 %v584
    %v1145 = vunpack.c.h.b16 %v584
    %v1146 = vunpack.c.l.b16 %v585
    %v1147 = vunpack.c.h.b16 %v585
    %v1148 = vunpack.c.l.b16 %v586
    %v1149 = vunpack.c.h.b16 %v586
    %v1150 = vunpack.c.l.b16 %v587
    %v1151 = vunpack.c.h.b16 %v587
    %v1152 = vunpack.c.l.b16 %v588
    %v1153 = vunpack.c.h.b16 %v588
    %v1154 = vunpack.c.l.b16 %v589
    %v1155 = vunpack.c.h.b16 %v589
    %v1156 = vunpack.c.l.b16 %v590
    %v1157 = vunpack.c.h.b16 %v590
    %v1158 = vunpack.c.l.b16 %v591
    %v1159 = vunpack.c.h.b16 %v591
    %v1160 = vunpack.c.l.b16 %v592
    %v1161 = vunpack.c.h.b16 %v592
    %v1162 = vunpack.c.l.b16 %v593
    %v1163 = vunpack.c.h.b16 %v593
    %v1164 = vunpack.c.l.b16 %v594
    %v1165 = vunpack.c.h.b16 %v594
    %v1166 = vunpack.c.l.b16 %v595
    %v1167 = vunpack.c.h.b16 %v595
    %v1168 = vunpack.c.l.b16 %v596
    %v1169 = vunpack.c.h.b16 %v596
    %v1170 = vunpack.c.l.b16 %v597
    %v1171 = vunpack.c.h.b16 %v597
    %v1172 = vunpack.c.l.b16 %v598
    %v1173 = vunpack.c.h.b16 %v598
    %v1174 = vunpack.c.l.b16 %v599
    %v1175 = vunpack.c.h.b16 %v599
    %v1176 = vunpack.c.l.b16 %v600
    %v1177 = vunpack.c.h.b16 %v600
    %v1178 = vunpack.c.l.b16 %v601
    %v1179 = vunpack.c.h.b16 %v601
    %v1180 = vunpack.c.l.b16 %v602
    %v1181 = vunpack.c.h.b16 %v602
    %v1182 = vunpack.c.l.b16 %v603
    %v1183 = vunpack.c.h.b16 %v603
    %v1184 = vunpack.c.l.b16 %v604
    %v1185 = vunpack.c.h.b16 %v604
    %v1186 = vunpack.c.l.b16 %v605
    %v1187 = vunpack.c.h.b16 %v605
    %v1188 = vunpack.c.l.b16 %v606
    %v1189 = vunpack.c.h.b16 %v606
    %v1190 = vunpack.c.l.b16 %v607
    %v1191 = vunpack.c.h.b16 %v607
    %v1192 = vunpack.c.l.b16 %v608
    %v1193 = vunpack.c.h.b16 %v608
    %v1194 = vunpack.c.l.b16 %v609
    %v1195 = vunpack.c.h.b16 %v609
    %v1196 = vunpack.c.l.b16 %v610
    %v1197 = vunpack.c.h.b16 %v610
    %v1198 = vunpack.c.l.b16 %v611
    %v1199 = vunpack.c.h.b16 %v611
    %v1200 = vunpack.c.l.b16 %v612
    %v1201 = vunpack.c.h.b16 %v612
    %v1202 = vunpack.c.l.b16 %v613
    %v1203 = vunpack.c.h.b16 %v613
    %v1204 = vunpack.c.l.b16 %v614
    %v1205 = vunpack.c.h.b16 %v614
    %v1206 = vunpack.c.l.b16 %v615
    %v1207 = vunpack.c.h.b16 %v615
    %v1208 = vunpack.c.l.b16 %v616
    %v1209 = vunpack.c.h.b16 %v616
    %v1210 = vunpack.c.l.b16 %v617
    %v1211 = vunpack.c.h.b16 %v617
    %v1212 = vunpack.c.l.b16 %v618
    %v1213 = vunpack.c.h.b16 %v618
    %v1214 = vunpack.c.l.b16 %v619
    %v1215 = vunpack.c.h.b16 %v619
    %v1216 = vunpack.c.l.b16 %v620
    %v1217 = vunpack.c.h.b16 %v620
    %v1218 = vunpack.c.l.b16 %v621
    %v1219 = vunpack.c.h.b16 %v621
    %v1220 = vunpack.c.l.b16 %v622
    %v1221 = vunpack.c.h.b16 %v622
    %v1222 = vunpack.c.l.b16 %v623
    %v1223 = vunpack.c.h.b16 %v623
    %v1224 = vunpack.c.l.b16 %v624
    %v1225 = vunpack.c.h.b16 %v624
    %v1226 = vunpack.c.l.b16 %v625
    %v1227 = vunpack.c.h.b16 %v625
    %v1228 = vunpack.c.l.b16 %v626
    %v1229 = vunpack.c.h.b16 %v626
    %v1230 = vunpack.c.l.b16 %v627
    %v1231 = vunpack.c.h.b16 %v627
    %v1232 = vunpack.c.l.b16 %v628
    %v1233 = vunpack.c.h.b16 %v628
    %v1234 = vunpack.c.l.b16 %v629
    %v1235 = vunpack.c.h.b16 %v629
    %v1236 = vunpack.c.l.b16 %v630
    %v1237 = vunpack.c.h.b16 %v630
    %v1238 = vunpack.c.l.b16 %v631
    %v1239 = vunpack.c.h.b16 %v631
    %v1240 = vunpack.c.l.b16 %v632
    %v1241 = vunpack.c.h.b16 %v632
    %v1242 = vunpack.c.l.b16 %v633
    %v1243 = vunpack.c.h.b16 %v633
    %v1244 = vunpack.c.l.b16 %v634
    %v1245 = vunpack.c.h.b16 %v634
    %v1246 = vunpack.c.l.b16 %v635
    %v1247 = vunpack.c.h.b16 %v635
    %v1248 = vunpack.c.l.b16 %v636
    %v1249 = vunpack.c.h.b16 %v636
    %v1250 = vunpack.c.l.b16 %v637
    %v1251 = vunpack.c.h.b16 %v637
    %v1252 = vunpack.c.l.b16 %v638
    %v1253 = vunpack.c.h.b16 %v638
    %v1254 = vunpack.c.l.b16 %v639
    %v1255 = vunpack.c.h.b16 %v639
    %v1256 = vunpack.c.l.b16 %v640
    %v1257 = vunpack.c.h.b16 %v640
    %v1258 = vunpack.c.l.b16 %v641
    %v1259 = vunpack.c.h.b16 %v641
    %v1260 = vunpack.c.l.b16 %v642
    %v1261 = vunpack.c.h.b16 %v642
    %v1262 = vunpack.c.l.b16 %v643
    %v1263 = vunpack.c.h.b16 %v643
    %v1264 = vunpack.c.l.b16 %v644
    %v1265 = vunpack.c.h.b16 %v644
    %v1266 = vunpack.c.l.b16 %v645
    %v1267 = vunpack.c.h.b16 %v645
    %v1268 = vunpack.c.l.b16 %v646
    %v1269 = vunpack.c.h.b16 %v646
    %v1270 = vunpack.c.l.b16 %v647
    %v1271 = vunpack.c.h.b16 %v647
    %v1272 = vunpack.c.l.b16 %v648
    %v1273 = vunpack.c.h.b16 %v648
    %v1274 = vunpack.c.l.b16 %v649
    %v1275 = vunpack.c.h.b16 %v649
    %v1276 = vunpack.c.l.b16 %v650
    %v1277 = vunpack.c.h.b16 %v650
    %v1278 = vunpack.c.l.b16 %v651
    %v1279 = vunpack.c.h.b16 %v651
    %v1280 = vunpack.c.l.b16 %v652
    %v1281 = vunpack.c.h.b16 %v652
    %v1282 = vunpack.c.l.b16 %v653
    %v1283 = vunpack.c.h.b16 %v653
    %v1284 = vunpack.c.l.b16 %v654
    %v1285 = vunpack.c.h.b16 %v654
    %v1286 = vunpack.c.l.b16 %v655
    %v1287 = vunpack.c.h.b16 %v655
    %v1288 = vunpack.c.l.b16 %v656
    %v1289 = vunpack.c.h.b16 %v656
    %v1290 = vunpack.c.l.b16 %v657
    %v1291 = vunpack.c.h.b16 %v657
    %v1292 = vunpack.c.l.b16 %v658
    %v1293 = vunpack.c.h.b16 %v658
    %v1294 = vunpack.c.l.b16 %v659
    %v1295 = vunpack.c.h.b16 %v659
    %v1296 = vunpack.c.l.b16 %v660
    %v1297 = vunpack.c.h.b16 %v660
    %v1298 = vunpack.c.l.b16 %v661
    %v1299 = vunpack.c.h.b16 %v661
    %v1300 = vunpack.c.l.b16 %v662
    %v1301 = vunpack.c.h.b16 %v662
    %v1302 = vunpack.c.l.b16 %v663
    %v1303 = vunpack.c.h.b16 %v663
    %v1304 = vunpack.c.l.b16 %v664
    %v1305 = vunpack.c.h.b16 %v664
    %v1306 = vunpack.c.l.b16 %v665
    %v1307 = vunpack.c.h.b16 %v665
    %v1308 = vunpack.c.l.b16 %v666
    %v1309 = vunpack.c.h.b16 %v666
    %v1310 = vunpack.c.l.b16 %v667
    %v1311 = vunpack.c.h.b16 %v667
    %v1312 = vunpack.c.l.b16 %v668
    %v1313 = vunpack.c.h.b16 %v668
    %v1314 = vunpack.c.l.b16 %v669
    %v1315 = vunpack.c.h.b16 %v669
    %v1316 = vunpack.c.l.b16 %v670
    %v1317 = vunpack.c.h.b16 %v670
    %v1318 = vunpack.c.l.b16 %v671
    %v1319 = vunpack.c.h.b16 %v671
    %v1320 = vunpack.c.l.b16 %v672
    %v1321 = vunpack.c.h.b16 %v672
    %v1322 = vunpack.c.l.b16 %v673
    %v1323 = vunpack.c.h.b16 %v673
    %v1324 = vunpack.c.l.b16 %v674
    %v1325 = vunpack.c.h.b16 %v674
    %v1326 = vunpack.c.l.b16 %v675
    %v1327 = vunpack.c.h.b16 %v675
    %v1328 = vunpack.c.l.b16 %v676
    %v1329 = vunpack.c.h.b16 %v676
    %v1330 = vunpack.c.l.b16 %v677
    %v1331 = vunpack.c.h.b16 %v677
    %v1332 = vunpack.c.l.b16 %v678
    %v1333 = vunpack.c.h.b16 %v678
    %v1334 = vunpack.c.l.b16 %v679
    %v1335 = vunpack.c.h.b16 %v679
    %v1336 = vunpack.c.l.b16 %v680
    %v1337 = vunpack.c.h.b16 %v680
    %v1338 = vunpack.c.l.b16 %v681
    %v1339 = vunpack.c.h.b16 %v681
    %v1340 = vunpack.c.l.b16 %v682
    %v1341 = vunpack.c.h.b16 %v682
    %v1342 = vunpack.c.l.b16 %v683
    %v1343 = vunpack.c.h.b16 %v683
    %v1344 = vunpack.c.l.b16 %v684
    %v1345 = vunpack.c.h.b16 %v684
    %v1346 = vunpack.c.l.b16 %v685
    %v1347 = vunpack.c.h.b16 %v685
    %v1348 = vunpack.c.l.b16 %v686
    %v1349 = vunpack.c.h.b16 %v686
    %v1350 = vunpack.c.l.b16 %v687
    %v1351 = vunpack.c.h.b16 %v687
    %v1352 = vunpack.c.l.b16 %v688
    %v1353 = vunpack.c.h.b16 %v688
    %v1354 = vunpack.c.l.b16 %v689
    %v1355 = vunpack.c.h.b16 %v689
    %v1356 = vunpack.c.l.b16 %v690
    %v1357 = vunpack.c.h.b16 %v690
    %v1358 = vunpack.c.l.b16 %v691
    %v1359 = vunpack.c.h.b16 %v691
    %v1360 = vunpack.c.l.b16 %v692
    %v1361 = vunpack.c.h.b16 %v692
    %v1362 = vunpack.c.l.b16 %v693
    %v1363 = vunpack.c.h.b16 %v693
    %v1364 = vunpack.c.l.b16 %v694
    %v1365 = vunpack.c.h.b16 %v694
    %v1366 = vunpack.c.l.b16 %v695
    %v1367 = vunpack.c.h.b16 %v695
    %v1368 = vunpack.c.l.b16 %v696
    %v1369 = vunpack.c.h.b16 %v696
    %v1370 = vunpack.c.l.b16 %v697
    %v1371 = vunpack.c.h.b16 %v697
    %v1372 = vunpack.c.l.b16 %v698
    %v1373 = vunpack.c.h.b16 %v698
    %v1374 = vunpack.c.l.b16 %v699
    %v1375 = vunpack.c.h.b16 %v699
    %v1376 = vunpack.c.l.b16 %v700
    %v1377 = vunpack.c.h.b16 %v700
    %v1378 = vunpack.c.l.b16 %v701
    %v1379 = vunpack.c.h.b16 %v701
    %v1380 = vunpack.c.l.b16 %v702
    %v1381 = vunpack.c.h.b16 %v702
    %v1382 = vunpack.c.l.b16 %v703
    %v1383 = vunpack.c.h.b16 %v703
    %v1384 = vunpack.c.l.b16 %v704
    %v1385 = vunpack.c.h.b16 %v704
    %v1386 = vunpack.c.l.b16 %v705
    %v1387 = vunpack.c.h.b16 %v705
    %v1388 = vunpack.c.l.b16 %v706
    %v1389 = vunpack.c.h.b16 %v706
    %v1390 = vunpack.c.l.b16 %v707
    %v1391 = vunpack.c.h.b16 %v707
    %v1392 = vunpack.c.l.b16 %v708
    %v1393 = vunpack.c.h.b16 %v708
    %v1394 = vunpack.c.l.b16 %v709
    %v1395 = vunpack.c.h.b16 %v709
    %v1396 = vunpack.c.l.b16 %v710
    %v1397 = vunpack.c.h.b16 %v710
    %v1398 = vunpack.c.l.b16 %v711
    %v1399 = vunpack.c.h.b16 %v711
    %v1400 = vunpack.c.l.b16 %v712
    %v1401 = vunpack.c.h.b16 %v712
    %v1402 = vunpack.c.l.b16 %v713
    %v1403 = vunpack.c.h.b16 %v713
    %v1404 = vunpack.c.l.b16 %v714
    %v1405 = vunpack.c.h.b16 %v714
    %v1406 = vunpack.c.l.b16 %v715
    %v1407 = vunpack.c.h.b16 %v715
    %v1408 = vunpack.c.l.b16 %v716
    %v1409 = vunpack.c.h.b16 %v716
    %v1410 = vunpack.c.l.b16 %v717
    %v1411 = vunpack.c.h.b16 %v717
    %v1412 = vunpack.c.l.b16 %v718
    %v1413 = vunpack.c.h.b16 %v718
    %v1414 = vunpack.c.l.b16 %v719
    %v1415 = vunpack.c.h.b16 %v719
    %v1416 = vunpack.c.l.b16 %v720
    %v1417 = vunpack.c.h.b16 %v720
    %v1418 = vunpack.c.l.b16 %v721
    %v1419 = vunpack.c.h.b16 %v721
    %v1420 = vunpack.c.l.b16 %v722
    %v1421 = vunpack.c.h.b16 %v722
    %v1422 = vunpack.c.l.b16 %v723
    %v1423 = vunpack.c.h.b16 %v723
    %v1424 = vunpack.c.l.b16 %v724
    %v1425 = vunpack.c.h.b16 %v724
    %v1426 = vunpack.c.l.b16 %v725
    %v1427 = vunpack.c.h.b16 %v725
    %v1428 = vunpack.c.l.b16 %v726
    %v1429 = vunpack.c.h.b16 %v726
    %v1430 = vunpack.c.l.b16 %v727
    %v1431 = vunpack.c.h.b16 %v727
    %v1432 = vunpack.c.l.b16 %v728
    %v1433 = vunpack.c.h.b16 %v728
    %v1434 = vunpack.c.l.b16 %v729
    %v1435 = vunpack.c.h.b16 %v729
    %v1436 = vunpack.c.l.b16 %v730
    %v1437 = vunpack.c.h.b16 %v730
    %v1438 = vunpack.c.l.b16 %v731
    %v1439 = vunpack.c.h.b16 %v731
    %v1440 = vunpack.c.l.b16 %v732
    %v1441 = vunpack.c.h.b16 %v732
    %v1442 = vunpack.c.l.b16 %v733
    %v1443 = vunpack.c.h.b16 %v733
    %v1444 = vunpack.c.l.b16 %v734
    %v1445 = vunpack.c.h.b16 %v734
    %v1446 = vunpack.c.l.b16 %v735
    %v1447 = vunpack.c.h.b16 %v735
    %v1448 = vunpack.c.l.b16 %v736
    %v1449 = vunpack.c.h.b16 %v736
    %v1450 = vunpack.c.l.b16 %v737
    %v1451 = vunpack.c.h.b16 %v737
    %v1452 = vunpack.c.l.b16 %v738
    %v1453 = vunpack.c.h.b16 %v738
    %v1454 = vunpack.c.l.b16 %v739
    %v1455 = vunpack.c.h.b16 %v739
    %v1456 = vunpack.c.l.b16 %v740
    %v1457 = vunpack.c.h.b16 %v740
    %v1458 = vunpack.c.l.b16 %v741
    %v1459 = vunpack.c.h.b16 %v741
    %v1460 = vunpack.c.l.b16 %v742
    %v1461 = vunpack.c.h.b16 %v742
    %v1462 = vunpack.c.l.b16 %v743
    %v1463 = vunpack.c.h.b16 %v743
    %v1464 = vunpack.c.l.b16 %v744
    %v1465 = vunpack.c.h.b16 %v744
    %v1466 = vunpack.c.l.b16 %v745
    %v1467 = vunpack.c.h.b16 %v745
    %v1468 = vunpack.c.l.b16 %v746
    %v1469 = vunpack.c.h.b16 %v746
    %v1470 = vunpack.c.l.b16 %v747
    %v1471 = vunpack.c.h.b16 %v747
    %v1472 = vunpack.c.l.b16 %v748
    %v1473 = vunpack.c.h.b16 %v748
    %v1474 = vunpack.c.l.b16 %v749
    %v1475 = vunpack.c.h.b16 %v749
    %v1476 = vunpack.c.l.b16 %v750
    %v1477 = vunpack.c.h.b16 %v750
    %v1478 = vunpack.c.l.b16 %v751
    %v1479 = vunpack.c.h.b16 %v751
    %v1480 = vunpack.c.l.b16 %v752
    %v1481 = vunpack.c.h.b16 %v752
    %v1482 = vunpack.c.l.b16 %v753
    %v1483 = vunpack.c.h.b16 %v753
    %v1484 = vunpack.c.l.b16 %v754
    %v1485 = vunpack.c.h.b16 %v754
    %v1486 = vunpack.c.l.b16 %v755
    %v1487 = vunpack.c.h.b16 %v755
    %v1488 = vunpack.c.l.b16 %v756
    %v1489 = vunpack.c.h.b16 %v756
    %v1490 = vunpack.c.l.b16 %v757
    %v1491 = vunpack.c.h.b16 %v757
    %v1492 = vunpack.c.l.b16 %v758
    %v1493 = vunpack.c.h.b16 %v758
    %v1494 = vunpack.c.l.b16 %v759
    %v1495 = vunpack.c.h.b16 %v759
    %v1496 = vunpack.c.l.b16 %v760
    %v1497 = vunpack.c.h.b16 %v760
    %v1498 = vunpack.c.l.b16 %v761
    %v1499 = vunpack.c.h.b16 %v761
    %v1500 = vunpack.c.l.b16 %v762
    %v1501 = vunpack.c.h.b16 %v762
    %v1502 = vunpack.c.l.b16 %v763
    %v1503 = vunpack.c.h.b16 %v763
    %v1504 = vunpack.c.l.b16 %v764
    %v1505 = vunpack.c.h.b16 %v764
    %v1506 = vunpack.c.l.b16 %v765
    %v1507 = vunpack.c.h.b16 %v765
    %v1508 = vunpack.c.l.b16 %v766
    %v1509 = vunpack.c.h.b16 %v766
    %v1510 = vunpack.c.l.b16 %v767
    %v1511 = vunpack.c.h.b16 %v767
    %v1512 = vunpack.c.l.b16 %v768
    %v1513 = vunpack.c.h.b16 %v768
    %v1514 = vunpack.c.l.b16 %v769
    %v1515 = vunpack.c.h.b16 %v769
    %v1516 = vunpack.c.l.b16 %v770
    %v1517 = vunpack.c.h.b16 %v770
    %v1518 = vunpack.c.l.b16 %v771
    %v1519 = vunpack.c.h.b16 %v771
    %v1520 = vunpack.c.l.b16 %v772
    %v1521 = vunpack.c.h.b16 %v772
    %v1522 = vunpack.c.l.b16 %v773
    %v1523 = vunpack.c.h.b16 %v773
    %v1524 = vunpack.c.l.b16 %v774
    %v1525 = vunpack.c.h.b16 %v774
    %v1526 = vunpack.c.l.b16 %v775
    %v1527 = vunpack.c.h.b16 %v775
    %v1528 = vunpack.c.l.b16 %v776
    %v1529 = vunpack.c.h.b16 %v776
    %v1530 = vunpack.c.l.b16 %v777
    %v1531 = vunpack.c.h.b16 %v777
    %v1532 = vunpack.c.l.b16 %v778
    %v1533 = vunpack.c.h.b16 %v778
    %v1534 = vunpack.c.l.b16 %v779
    %v1535 = vunpack.c.h.b16 %v779
    %v1536 = vunpack.c.l.b16 %v780
    %v1537 = vunpack.c.h.b16 %v780
    %v1538 = vunpack.c.l.b16 %v781
    %v1539 = vunpack.c.h.b16 %v781
    %v1540 = vunpack.c.l.b16 %v782
    %v1541 = vunpack.c.h.b16 %v782
    %v1542 = vunpack.c.l.b16 %v783
    %v1543 = vunpack.c.h.b16 %v783
    %v1544 = vunpack.c.l.b16 %v784
    %v1545 = vunpack.c.h.b16 %v784
    %v1546 = vunpack.c.l.b16 %v785
    %v1547 = vunpack.c.h.b16 %v785
    %v1548 = vunpack.c.l.b16 %v786
    %v1549 = vunpack.c.h.b16 %v786
    %v1550 = vunpack.c.l.b16 %v787
    %v1551 = vunpack.c.h.b16 %v787
    %v1552 = vunpack.c.l.b16 %v788
    %v1553 = vunpack.c.h.b16 %v788
    %v1554 = vunpack.c.l.b16 %v789
    %v1555 = vunpack.c.h.b16 %v789
    %v1556 = vunpack.c.l.b16 %v790
    %v1557 = vunpack.c.h.b16 %v790
    %v1558 = vunpack.c.l.b16 %v791
    %v1559 = vunpack.c.h.b16 %v791
    %v1560 = vunpack.c.l.b16 %v792
    %v1561 = vunpack.c.h.b16 %v792
    %v1562 = vunpack.c.l.b16 %v793
    %v1563 = vunpack.c.h.b16 %v793
    %v1564 = vunpack.c.l.b16 %v794
    %v1565 = vunpack.c.h.b16 %v794
    %v1566 = vunpack.c.l.b16 %v795
    %v1567 = vunpack.c.h.b16 %v795
    %v1568 = vunpack.c.l.b16 %v796
    %v1569 = vunpack.c.h.b16 %v796
    %v1570 = vunpack.c.l.b16 %v797
    %v1571 = vunpack.c.h.b16 %v797
    %v1572 = vunpack.c.l.b16 %v798
    %v1573 = vunpack.c.h.b16 %v798
    %v1574 = vunpack.c.l.b16 %v799
    %v1575 = vunpack.c.h.b16 %v799
    %v1576 = vunpack.c.l.b16 %v800
    %v1577 = vunpack.c.h.b16 %v800
    %v1578 = vunpack.c.l.b16 %v801
    %v1579 = vunpack.c.h.b16 %v801
    %v1580 = vunpack.c.l.b16 %v802
    %v1581 = vunpack.c.h.b16 %v802
    %v1582 = vunpack.c.l.b16 %v803
    %v1583 = vunpack.c.h.b16 %v803
    %v1584 = vunpack.c.l.b16 %v804
    %v1585 = vunpack.c.h.b16 %v804
    %v1586 = vunpack.c.l.b16 %v805
    %v1587 = vunpack.c.h.b16 %v805
    %v1588 = vunpack.c.l.b16 %v806
    %v1589 = vunpack.c.h.b16 %v806
    %v1590 = vunpack.c.l.b16 %v807
    %v1591 = vunpack.c.h.b16 %v807
    %v1592 = vunpack.c.l.b16 %v808
    %v1593 = vunpack.c.h.b16 %v808
    %v1594 = vunpack.c.l.b16 %v809
    %v1595 = vunpack.c.h.b16 %v809
    %v1596 = vunpack.c.l.b16 %v810
    %v1597 = vunpack.c.h.b16 %v810
    %v1598 = vunpack.c.l.b16 %v811
    %v1599 = vunpack.c.h.b16 %v811
    %v1600 = vunpack.c.l.b16 %v812
    %v1601 = vunpack.c.h.b16 %v812
    %v1602 = vpack.c.b16 %v1094, %v1090
    %v1603 = vpack.c.b16 %v1095, %v1091
    %v1604 = vpack.c.b16 %v1096, %v1092
    %v1605 = vpack.c.b16 %v1097, %v1093
    %v1606 = vpack.c.b16 %v1102, %v1098
    %v1607 = vpack.c.b16 %v1103, %v1099
    %v1608 = vpack.c.b16 %v1104, %v1100
    %v1609 = vpack.c.b16 %v1105, %v1101
    %v1610 = vpack.c.b16 %v1110, %v1106
    %v1611 = vpack.c.b16 %v1111, %v1107
    %v1612 = vpack.c.b16 %v1112, %v1108
    %v1613 = vpack.c.b16 %v1113, %v1109
    %v1614 = vpack.c.b16 %v1118, %v1114
    %v1615 = vpack.c.b16 %v1119, %v1115
    %v1616 = vpack.c.b16 %v1120, %v1116
    %v1617 = vpack.c.b16 %v1121, %v1117
    %v1618 = vpack.c.b16 %v1126, %v1122
    %v1619 = vpack.c.b16 %v1127, %v1123
    %v1620 = vpack.c.b16 %v1128, %v1124
    %v1621 = vpack.c.b16 %v1129, %v1125
    %v1622 = vpack.c.b16 %v1134, %v1130
    %v1623 = vpack.c.b16 %v1135, %v1131
    %v1624 = vpack.c.b16 %v1136, %v1132
    %v1625 = vpack.c.b16 %v1137, %v1133
    %v1626 = vpack.c.b16 %v1142, %v1138
    %v1627 = vpack.c.b16 %v1143, %v1139
    %v1628 = vpack.c.b16 %v1144, %v1140
    %v1629 = vpack.c.b16 %v1145, %v1141
    %v1630 = vpack.c.b16 %v1150, %v1146
    %v1631 = vpack.c.b16 %v1151, %v1147
    %v1632 = vpack.c.b16 %v1152, %v1148
    %v1633 = vpack.c.b16 %v1153, %v1149
    %v1634 = vpack.c.b16 %v1158, %v1154
    %v1635 = vpack.c.b16 %v1159, %v1155
    %v1636 = vpack.c.b16 %v1160, %v1156
    %v1637 = vpack.c.b16 %v1161, %v1157
    %v1638 = vpack.c.b16 %v1166, %v1162
    %v1639 = vpack.c.b16 %v1167, %v1163
    %v1640 = vpack.c.b16 %v1168, %v1164
    %v1641 = vpack.c.b16 %v1169, %v1165
    %v1642 = vpack.c.b16 %v1174, %v1170
    %v1643 = vpack.c.b16 %v1175, %v1171
    %v1644 = vpack.c.b16 %v1176, %v1172
    %v1645 = vpack.c.b16 %v1177, %v1173
    %v1646 = vpack.c.b16 %v1182, %v1178
    %v1647 = vpack.c.b16 %v1183, %v1179
    %v1648 = vpack.c.b16 %v1184, %v1180
    %v1649 = vpack.c.b16 %v1185, %v1181
    %v1650 = vpack.c.b16 %v1190, %v1186
    %v1651 = vpack.c.b16 %v1191, %v1187
    %v1652 = vpack.c.b16 %v1192, %v1188
    %v1653 = vpack.c.b16 %v1193, %v1189
    %v1654 = vpack.c.b16 %v1198, %v1194
    %v1655 = vpack.c.b16 %v1199, %v1195
    %v1656 = vpack.c.b16 %v1200, %v1196
    %v1657 = vpack.c.b16 %v1201, %v1197
    %v1658 = vpack.c.b16 %v1206, %v1202
    %v1659 = vpack.c.b16 %v1207, %v1203
    %v1660 = vpack.c.b16 %v1208, %v1204
    %v1661 = vpack.c.b16 %v1209, %v1205
    %v1662 = vpack.c.b16 %v1214, %v1210
    %v1663 = vpack.c.b16 %v1215, %v1211
    %v1664 = vpack.c.b16 %v1216, %v1212
    %v1665 = vpack.c.b16 %v1217, %v1213
    %v1666 = vpack.c.b16 %v1222, %v1218
    %v1667 = vpack.c.b16 %v1223, %v1219
    %v1668 = vpack.c.b16 %v1224, %v1220
    %v1669 = vpack.c.b16 %v1225, %v1221
    %v1670 = vpack.c.b16 %v1230, %v1226
    %v1671 = vpack.c.b16 %v1231, %v1227
    %v1672 = vpack.c.b16 %v1232, %v1228
    %v1673 = vpack.c.b16 %v1233, %v1229
    %v1674 = vpack.c.b16 %v1238, %v1234
    %v1675 = vpack.c.b16 %v1239, %v1235
    %v1676 = vpack.c.b16 %v1240, %v1236
    %v1677 = vpack.c.b16 %v1241, %v1237
    %v1678 = vpack.c.b16 %v1246, %v1242
    %v1679 = vpack.c.b16 %v1247, %v1243
    %v1680 = vpack.c.b16 %v1248, %v1244
    %v1681 = vpack.c.b16 %v1249, %v1245
    %v1682 = vpack.c.b16 %v1254, %v1250
    %v1683 = vpack.c.b16 %v1255, %v1251
    %v1684 = vpack.c.b16 %v1256, %v1252
    %v1685 = vpack.c.b16 %v1257, %v1253
    %v1686 = vpack.c.b16 %v1262, %v1258
    %v1687 = vpack.c.b16 %v1263, %v1259
    %v1688 = vpack.c.b16 %v1264, %v1260
    %v1689 = vpack.c.b16 %v1265, %v1261
    %v1690 = vpack.c.b16 %v1270, %v1266
    %v1691 = vpack.c.b16 %v1271, %v1267
    %v1692 = vpack.c.b16 %v1272, %v1268
    %v1693 = vpack.c.b16 %v1273, %v1269
    %v1694 = vpack.c.b16 %v1278, %v1274
    %v1695 = vpack.c.b16 %v1279, %v1275
    %v1696 = vpack.c.b16 %v1280, %v1276
    %v1697 = vpack.c.b16 %v1281, %v1277
    %v1698 = vpack.c.b16 %v1286, %v1282
    %v1699 = vpack.c.b16 %v1287, %v1283
    %v1700 = vpack.c.b16 %v1288, %v1284
    %v1701 = vpack.c.b16 %v1289, %v1285
    %v1702 = vpack.c.b16 %v1294, %v1290
    %v1703 = vpack.c.b16 %v1295, %v1291
    %v1704 = vpack.c.b16 %v1296, %v1292
    %v1705 = vpack.c.b16 %v1297, %v1293
    %v1706 = vpack.c.b16 %v1302, %v1298
    %v1707 = vpack.c.b16 %v1303, %v1299
    %v1708 = vpack.c.b16 %v1304, %v1300
    %v1709 = vpack.c.b16 %v1305, %v1301
    %v1710 = vpack.c.b16 %v1310, %v1306
    %v1711 = vpack.c.b16 %v1311, %v1307
    %v1712 = vpack.c.b16 %v1312, %v1308
    %v1713 = vpack.c.b16 %v1313, %v1309
    %v1714 = vpack.c.b16 %v1318, %v1314
    %v1715 = vpack.c.b16 %v1319, %v1315
    %v1716 = vpack.c.b16 %v1320, %v1316
    %v1717 = vpack.c.b16 %v1321, %v1317
    %v1718 = vpack.c.b16 %v1326, %v1322
    %v1719 = vpack.c.b16 %v1327, %v1323
    %v1720 = vpack.c.b16 %v1328, %v1324
    %v1721 = vpack.c.b16 %v1329, %v1325
    %v1722 = vpack.c.b16 %v1334, %v1330
    %v1723 = vpack.c.b16 %v1335, %v1331
    %v1724 = vpack.c.b16 %v1336, %v1332
    %v1725 = vpack.c.b16 %v1337, %v1333
    %v1726 = vpack.c.b16 %v1342, %v1338
    %v1727 = vpack.c.b16 %v1343, %v1339
    %v1728 = vpack.c.b16 %v1344, %v1340
    %v1729 = vpack.c.b16 %v1345, %v1341
    %v1730 = vpack.c.b16 %v1350, %v1346
    %v1731 = vpack.c.b16 %v1351, %v1347
    %v1732 = vpack.c.b16 %v1352, %v1348
    %v1733 = vpack.c.b16 %v1353, %v1349
    %v1734 = vpack.c.b16 %v1358, %v1354
    %v1735 = vpack.c.b16 %v1359, %v1355
    %v1736 = vpack.c.b16 %v1360, %v1356
    %v1737 = vpack.c.b16 %v1361, %v1357
    %v1738 = vpack.c.b16 %v1366, %v1362
    %v1739 = vpack.c.b16 %v1367, %v1363
    %v1740 = vpack.c.b16 %v1368, %v1364
    %v1741 = vpack.c.b16 %v1369, %v1365
    %v1742 = vpack.c.b16 %v1374, %v1370
    %v1743 = vpack.c.b16 %v1375, %v1371
    %v1744 = vpack.c.b16 %v1376, %v1372
    %v1745 = vpack.c.b16 %v1377, %v1373
    %v1746 = vpack.c.b16 %v1382, %v1378
    %v1747 = vpack.c.b16 %v1383, %v1379
    %v1748 = vpack.c.b16 %v1384, %v1380
    %v1749 = vpack.c.b16 %v1385, %v1381
    %v1750 = vpack.c.b16 %v1390, %v1386
    %v1751 = vpack.c.b16 %v1391, %v1387
    %v1752 = vpack.c.b16 %v1392, %v1388
    %v1753 = vpack.c.b16 %v1393, %v1389
    %v1754 = vpack.c.b16 %v1398, %v1394
    %v1755 = vpack.c.b16 %v1399, %v1395
    %v1756 = vpack.c.b16 %v1400, %v1396
    %v1757 = vpack.c.b16 %v1401, %v1397
    %v1758 = vpack.c.b16 %v1406, %v1402
    %v1759 = vpack.c.b16 %v1407, %v1403
    %v1760 = vpack.c.b16 %v1408, %v1404
    %v1761 = vpack.c.b16 %v1409, %v1405
    %v1762 = vpack.c.b16 %v1414, %v1410
    %v1763 = vpack.c.b16 %v1415, %v1411
    %v1764 = vpack.c.b16 %v1416, %v1412
    %v1765 = vpack.c.b16 %v1417, %v1413
    %v1766 = vpack.c.b16 %v1422, %v1418
    %v1767 = vpack.c.b16 %v1423, %v1419
    %v1768 = vpack.c.b16 %v1424, %v1420
    %v1769 = vpack.c.b16 %v1425, %v1421
    %v1770 = vpack.c.b16 %v1430, %v1426
    %v1771 = vpack.c.b16 %v1431, %v1427
    %v1772 = vpack.c.b16 %v1432, %v1428
    %v1773 = vpack.c.b16 %v1433, %v1429
    %v1774 = vpack.c.b16 %v1438, %v1434
    %v1775 = vpack.c.b16 %v1439, %v1435
    %v1776 = vpack.c.b16 %v1440, %v1436
    %v1777 = vpack.c.b16 %v1441, %v1437
    %v1778 = vpack.c.b16 %v1446, %v1442
    %v1779 = vpack.c.b16 %v1447, %v1443
    %v1780 = vpack.c.b16 %v1448, %v1444
    %v1781 = vpack.c.b16 %v1449, %v1445
    %v1782 = vpack.c.b16 %v1454, %v1450
    %v1783 = vpack.c.b16 %v1455, %v1451
    %v1784 = vpack.c.b16 %v1456, %v1452
    %v1785 = vpack.c.b16 %v1457, %v1453
    %v1786 = vpack.c.b16 %v1462, %v1458
    %v1787 = vpack.c.b16 %v1463, %v1459
    %v1788 = vpack.c.b16 %v1464, %v1460
    %v1789 = vpack.c.b16 %v1465, %v1461
    %v1790 = vpack.c.b16 %v1470, %v1466
    %v1791 = vpack.c.b16 %v1471, %v1467
    %v1792 = vpack.c.b16 %v1472, %v1468
    %v1793 = vpack.c.b16 %v1473, %v1469
    %v1794 = vpack.c.b16 %v1478, %v1474
    %v1795 = vpack.c.b16 %v1479, %v1475
    %v1796 = vpack.c.b16 %v1480, %v1476
    %v1797 = vpack.c.b16 %v1481, %v1477
    %v1798 = vpack.c.b16 %v1486, %v1482
    %v1799 = vpack.c.b16 %v1487, %v1483
    %v1800 = vpack.c.b16 %v1488, %v1484
    %v1801 = vpack.c.b16 %v1489, %v1485
    %v1802 = vpack.c.b16 %v1494, %v1490
    %v1803 = vpack.c.b16 %v1495, %v1491
    %v1804 = vpack.c.b16 %v1496, %v1492
    %v1805 = vpack.c.b16 %v1497, %v1493
    %v1806 = vpack.c.b16 %v1502, %v1498
    %v1807 = vpack.c.b16 %v1503, %v1499
    %v1808 = vpack.c.b16 %v1504, %v1500
    %v1809 = vpack.c.b16 %v1505, %v1501
    %v1810 = vpack.c.b16 %v1510, %v1506
    %v1811 = vpack.c.b16 %v1511, %v1507
    %v1812 = vpack.c.b16 %v1512, %v1508
    %v1813 = vpack.c.b16 %v1513, %v1509
    %v1814 = vpack.c.b16 %v1518, %v1514
    %v1815 = vpack.c.b16 %v1519, %v1515
    %v1816 = vpack.c.b16 %v1520, %v1516
    %v1817 = vpack.c.b16 %v1521, %v1517
    %v1818 = vpack.c.b16 %v1526, %v1522
    %v1819 = vpack.c.b16 %v1527, %v1523
    %v1820 = vpack.c.b16 %v1528, %v1524
    %v1821 = vpack.c.b16 %v1529, %v1525
    %v1822 = vpack.c.b16 %v1534, %v1530
    %v1823 = vpack.c.b16 %v1535, %v1531
    %v1824 = vpack.c.b16 %v1536, %v1532
    %v1825 = vpack.c.b16 %v1537, %v1533
    %v1826 = vpack.c.b16 %v1542, %v1538
    %v1827 = vpack.c.b16 %v1543, %v1539
    %v1828 = vpack.c.b16 %v1544, %v1540
    %v1829 = vpack.c.b16 %v1545, %v1541
    %v1830 = vpack.c.b16 %v1550, %v1546
    %v1831 = vpack.c.b16 %v1551, %v1547
    %v1832 = vpack.c.b16 %v1552, %v1548
    %v1833 = vpack.c.b16 %v1553, %v1549
    %v1834 = vpack.c.b16 %v1558, %v1554
    %v1835 = vpack.c.b16 %v1559, %v1555
    %v1836 = vpack.c.b16 %v1560, %v1556
    %v1837 = vpack.c.b16 %v1561, %v1557
    %v1838 = vpack.c.b16 %v1566, %v1562
    %v1839 = vpack.c.b16 %v1567, %v1563
    %v1840 = vpack.c.b16 %v1568, %v1564
    %v1841 = vpack.c.b16 %v1569, %v1565
    %v1842 = vpack.c.b16 %v1574, %v1570
    %v1843 = vpack.c.b16 %v1575, %v1571
    %v1844 = vpack.c.b16 %v1576, %v1572
    %v1845 = vpack.c.b16 %v1577, %v1573
    %v1846 = vpack.c.b16 %v1582, %v1578
    %v1847 = vpack.c.b16 %v1583, %v1579
    %v1848 = vpack.c.b16 %v1584, %v1580
    %v1849 = vpack.c.b16 %v1585, %v1581
    %v1850 = vpack.c.b16 %v1590, %v1586
    %v1851 = vpack.c.b16 %v1591, %v1587
    %v1852 = vpack.c.b16 %v1592, %v1588
    %v1853 = vpack.c.b16 %v1593, %v1589
    %v1854 = vpack.c.b16 %v1598, %v1594
    %v1855 = vpack.c.b16 %v1599, %v1595
    %v1856 = vpack.c.b16 %v1600, %v1596
    %v1857 = vpack.c.b16 %v1601, %v1597
    %2114 = vmatprep.subr.bf16.mxu0 %v1631
    %2115 = vmatpush1.bf16.msra.mxu0 %v1630
    %2116 = vmatprep.subr.bf16.mxu0 %v1627
    %2117 = vmatpush1.bf16.msra.mxu0 %v1626
    %2118 = vmatprep.subr.bf16.mxu0 %v1623
    %2119 = vmatpush1.bf16.msra.mxu0 %v1622
    %2120 = vmatprep.subr.bf16.mxu0 %v1619
    %2121 = vmatpush1.bf16.msra.mxu0 %v1618
    %2122 = vmatprep.subr.bf16.mxu0 %v1615
    %2123 = vmatpush1.bf16.msra.mxu0 %v1614
    %2124 = vmatprep.subr.bf16.mxu0 %v1611
    %2125 = vmatpush1.bf16.msra.mxu0 %v1610
    %2126 = vmatprep.subr.bf16.mxu0 %v1607
    %2127 = vmatpush1.bf16.msra.mxu0 %v1606
    %2128 = vmatprep.subr.bf16.mxu0 %v1603
    %2129 = vmatpush1.bf16.msra.mxu0 %v1602
    %2130 = vmatprep.subr.bf16.mxu0 %v1663
    %2131 = vmatpush2.bf16.msra.mxu0 %v1662
    %2132 = vmatprep.subr.bf16.mxu0 %v1659
    %2133 = vmatpush2.bf16.msra.mxu0 %v1658
    %2134 = vmatprep.subr.bf16.mxu0 %v1655
    %2135 = vmatpush2.bf16.msra.mxu0 %v1654
    %2136 = vmatprep.subr.bf16.mxu0 %v1651
    %2137 = vmatpush2.bf16.msra.mxu0 %v1650
    %2138 = vmatprep.subr.bf16.mxu0 %v1647
    %2139 = vmatpush2.bf16.msra.mxu0 %v1646
    %2140 = vmatprep.subr.bf16.mxu0 %v1643
    %2141 = vmatpush2.bf16.msra.mxu0 %v1642
    %2142 = vmatprep.subr.bf16.mxu0 %v1639
    %2143 = vmatpush2.bf16.msra.mxu0 %v1638
    %2144 = vmatprep.subr.bf16.mxu0 %v1635
    %2145 = vmatpush2.bf16.msra.mxu0 %v1634
    %2146 = vmatprep.mubr.bf16.mxu0 %v549
    %2147 = vmatmul.mubr.bf16.gmra.mxu0 %v548
    %v2148 = vpop.f32.mrf.mxu0
    %v2149 = vadd.f32 %v817, %v2148
    %v2150 = vpop.f32.mrf.mxu0
    %v2151 = vadd.f32 %v821, %v2150
    %v2152 = vpop.f32.mrf.mxu0
    %v2153 = vpop.f32.mrf.mxu0
    %2154 = vdwg.mxu0
    %2155 = vmatprep.subr.bf16.mxu0 %v1695
    %2156 = vmatpush1.bf16.msra.mxu0 %v1694
    %2157 = vmatprep.subr.bf16.mxu0 %v1691
    %2158 = vmatpush1.bf16.msra.mxu0 %v1690
    %2159 = vmatprep.subr.bf16.mxu0 %v1687
    %2160 = vmatpush1.bf16.msra.mxu0 %v1686
    %2161 = vmatprep.subr.bf16.mxu0 %v1683
    %2162 = vmatpush1.bf16.msra.mxu0 %v1682
    %2163 = vmatprep.subr.bf16.mxu0 %v1679
    %2164 = vmatpush1.bf16.msra.mxu0 %v1678
    %2165 = vmatprep.subr.bf16.mxu0 %v1675
    %2166 = vmatpush1.bf16.msra.mxu0 %v1674
    %2167 = vmatprep.subr.bf16.mxu0 %v1671
    %2168 = vmatpush1.bf16.msra.mxu0 %v1670
    %2169 = vmatprep.subr.bf16.mxu0 %v1667
    %2170 = vmatpush1.bf16.msra.mxu0 %v1666
    %2171 = vmatprep.subr.bf16.mxu0 %v1727
    %2172 = vmatpush2.bf16.msra.mxu0 %v1726
    %2173 = vmatprep.subr.bf16.mxu0 %v1723
    %2174 = vmatpush2.bf16.msra.mxu0 %v1722
    %2175 = vmatprep.subr.bf16.mxu0 %v1719
    %2176 = vmatpush2.bf16.msra.mxu0 %v1718
    %2177 = vmatprep.subr.bf16.mxu0 %v1715
    %2178 = vmatpush2.bf16.msra.mxu0 %v1714
    %2179 = vmatprep.subr.bf16.mxu0 %v1711
    %2180 = vmatpush2.bf16.msra.mxu0 %v1710
    %2181 = vmatprep.subr.bf16.mxu0 %v1707
    %2182 = vmatpush2.bf16.msra.mxu0 %v1706
    %2183 = vmatprep.subr.bf16.mxu0 %v1703
    %2184 = vmatpush2.bf16.msra.mxu0 %v1702
    %2185 = vmatprep.subr.bf16.mxu0 %v1699
    %2186 = vmatpush2.bf16.msra.mxu0 %v1698
    %2187 = vmatprep.mubr.bf16.mxu0 %v551
    %2188 = vmatmul.mubr.bf16.gmra.mxu0 %v550
    %v2189 = vpop.f32.mrf.mxu0
    %v2190 = vadd.f32 %v2149, %v2189
    %v2191 = vpop.f32.mrf.mxu0
    %v2192 = vadd.f32 %v2151, %v2191
    %v2193 = vpop.f32.mrf.mxu0
    %v2194 = vpop.f32.mrf.mxu0
    %2195 = vdwg.mxu0
    %2196 = vmatprep.subr.bf16.mxu0 %v1759
    %2197 = vmatpush1.bf16.msra.mxu0 %v1758
    %2198 = vmatprep.subr.bf16.mxu0 %v1755
    %2199 = vmatpush1.bf16.msra.mxu0 %v1754
    %2200 = vmatprep.subr.bf16.mxu0 %v1751
    %2201 = vmatpush1.bf16.msra.mxu0 %v1750
    %2202 = vmatprep.subr.bf16.mxu0 %v1747
    %2203 = vmatpush1.bf16.msra.mxu0 %v1746
    %2204 = vmatprep.subr.bf16.mxu0 %v1743
    %2205 = vmatpush1.bf16.msra.mxu0 %v1742
    %2206 = vmatprep.subr.bf16.mxu0 %v1739
    %2207 = vmatpush1.bf16.msra.mxu0 %v1738
    %2208 = vmatprep.subr.bf16.mxu0 %v1735
    %2209 = vmatpush1.bf16.msra.mxu0 %v1734
    %2210 = vmatprep.subr.bf16.mxu0 %v1731
    %2211 = vmatpush1.bf16.msra.mxu0 %v1730
    %2212 = vmatprep.subr.bf16.mxu0 %v1791
    %2213 = vmatpush2.bf16.msra.mxu0 %v1790
    %2214 = vmatprep.subr.bf16.mxu0 %v1787
    %2215 = vmatpush2.bf16.msra.mxu0 %v1786
    %2216 = vmatprep.subr.bf16.mxu0 %v1783
    %2217 = vmatpush2.bf16.msra.mxu0 %v1782
    %2218 = vmatprep.subr.bf16.mxu0 %v1779
    %2219 = vmatpush2.bf16.msra.mxu0 %v1778
    %2220 = vmatprep.subr.bf16.mxu0 %v1775
    %2221 = vmatpush2.bf16.msra.mxu0 %v1774
    %2222 = vmatprep.subr.bf16.mxu0 %v1771
    %2223 = vmatpush2.bf16.msra.mxu0 %v1770
    %2224 = vmatprep.subr.bf16.mxu0 %v1767
    %2225 = vmatpush2.bf16.msra.mxu0 %v1766
    %2226 = vmatprep.subr.bf16.mxu0 %v1763
    %2227 = vmatpush2.bf16.msra.mxu0 %v1762
    %2228 = vmatprep.mubr.bf16.mxu0 %v553
    %2229 = vmatmul.mubr.bf16.gmra.mxu0 %v552
    %v2230 = vpop.f32.mrf.mxu0
    %v2231 = vadd.f32 %v2190, %v2230
    %v2232 = vpop.f32.mrf.mxu0
    %v2233 = vadd.f32 %v2192, %v2232
    %v2234 = vpop.f32.mrf.mxu0
    %v2235 = vpop.f32.mrf.mxu0
    %2236 = vdwg.mxu0
    %2237 = vmatprep.subr.bf16.mxu0 %v1823
    %2238 = vmatpush1.bf16.msra.mxu0 %v1822
    %2239 = vmatprep.subr.bf16.mxu0 %v1819
    %2240 = vmatpush1.bf16.msra.mxu0 %v1818
    %2241 = vmatprep.subr.bf16.mxu0 %v1815
    %2242 = vmatpush1.bf16.msra.mxu0 %v1814
    %2243 = vmatprep.subr.bf16.mxu0 %v1811
    %2244 = vmatpush1.bf16.msra.mxu0 %v1810
    %2245 = vmatprep.subr.bf16.mxu0 %v1807
    %2246 = vmatpush1.bf16.msra.mxu0 %v1806
    %2247 = vmatprep.subr.bf16.mxu0 %v1803
    %2248 = vmatpush1.bf16.msra.mxu0 %v1802
    %2249 = vmatprep.subr.bf16.mxu0 %v1799
    %2250 = vmatpush1.bf16.msra.mxu0 %v1798
    %2251 = vmatprep.subr.bf16.mxu0 %v1795
    %2252 = vmatpush1.bf16.msra.mxu0 %v1794
    %2253 = vmatprep.subr.bf16.mxu0 %v1855
    %2254 = vmatpush2.bf16.msra.mxu0 %v1854
    %2255 = vmatprep.subr.bf16.mxu0 %v1851
    %2256 = vmatpush2.bf16.msra.mxu0 %v1850
    %2257 = vmatprep.subr.bf16.mxu0 %v1847
    %2258 = vmatpush2.bf16.msra.mxu0 %v1846
    %2259 = vmatprep.subr.bf16.mxu0 %v1843
    %2260 = vmatpush2.bf16.msra.mxu0 %v1842
    %2261 = vmatprep.subr.bf16.mxu0 %v1839
    %2262 = vmatpush2.bf16.msra.mxu0 %v1838
    %2263 = vmatprep.subr.bf16.mxu0 %v1835
    %2264 = vmatpush2.bf16.msra.mxu0 %v1834
    %2265 = vmatprep.subr.bf16.mxu0 %v1831
    %2266 = vmatpush2.bf16.msra.mxu0 %v1830
    %2267 = vmatprep.subr.bf16.mxu0 %v1827
    %2268 = vmatpush2.bf16.msra.mxu0 %v1826
    %2269 = vmatprep.mubr.bf16.mxu0 %v555
    %2270 = vmatmul.mubr.bf16.gmra.mxu0 %v554
    %v2271 = vpop.f32.mrf.mxu0
    %v2272 = vadd.f32 %v2231, %v2271
    %v2273 = vpop.f32.mrf.mxu0
    %v2274 = vadd.f32 %v2233, %v2273
    %v2275 = vpop.f32.mrf.mxu0
    %v2276 = vpop.f32.mrf.mxu0
    %2277 = vdwg.mxu0
    %2278 = vmatprep.subr.bf16.mxu0 %v1633
    %2279 = vmatpush1.bf16.msra.mxu0 %v1632
    %2280 = vmatprep.subr.bf16.mxu0 %v1629
    %2281 = vmatpush1.bf16.msra.mxu0 %v1628
    %2282 = vmatprep.subr.bf16.mxu0 %v1625
    %2283 = vmatpush1.bf16.msra.mxu0 %v1624
    %2284 = vmatprep.subr.bf16.mxu0 %v1621
    %2285 = vmatpush1.bf16.msra.mxu0 %v1620
    %2286 = vmatprep.subr.bf16.mxu0 %v1617
    %2287 = vmatpush1.bf16.msra.mxu0 %v1616
    %2288 = vmatprep.subr.bf16.mxu0 %v1613
    %2289 = vmatpush1.bf16.msra.mxu0 %v1612
    %2290 = vmatprep.subr.bf16.mxu0 %v1609
    %2291 = vmatpush1.bf16.msra.mxu0 %v1608
    %2292 = vmatprep.subr.bf16.mxu0 %v1605
    %2293 = vmatpush1.bf16.msra.mxu0 %v1604
    %2294 = vmatprep.subr.bf16.mxu0 %v1665
    %2295 = vmatpush2.bf16.msra.mxu0 %v1664
    %2296 = vmatprep.subr.bf16.mxu0 %v1661
    %2297 = vmatpush2.bf16.msra.mxu0 %v1660
    %2298 = vmatprep.subr.bf16.mxu0 %v1657
    %2299 = vmatpush2.bf16.msra.mxu0 %v1656
    %2300 = vmatprep.subr.bf16.mxu0 %v1653
    %2301 = vmatpush2.bf16.msra.mxu0 %v1652
    %2302 = vmatprep.subr.bf16.mxu0 %v1649
    %2303 = vmatpush2.bf16.msra.mxu0 %v1648
    %2304 = vmatprep.subr.bf16.mxu0 %v1645
    %2305 = vmatpush2.bf16.msra.mxu0 %v1644
    %2306 = vmatprep.subr.bf16.mxu0 %v1641
    %2307 = vmatpush2.bf16.msra.mxu0 %v1640
    %2308 = vmatprep.subr.bf16.mxu0 %v1637
    %2309 = vmatpush2.bf16.msra.mxu0 %v1636
    %2310 = vmatprep.mubr.bf16.mxu0 %v549
    %2311 = vmatmul.mubr.bf16.gmra.mxu0 %v548
    %v2312 = vpop.f32.mrf.mxu0
    %v2313 = vadd.f32 %v825, %v2312
    %v2314 = vpop.f32.mrf.mxu0
    %v2315 = vadd.f32 %v829, %v2314
    %v2316 = vpop.f32.mrf.mxu0
    %v2317 = vpop.f32.mrf.mxu0
    %2318 = vdwg.mxu0
    %2319 = vmatprep.subr.bf16.mxu0 %v1697
    %2320 = vmatpush1.bf16.msra.mxu0 %v1696
    %2321 = vmatprep.subr.bf16.mxu0 %v1693
    %2322 = vmatpush1.bf16.msra.mxu0 %v1692
    %2323 = vmatprep.subr.bf16.mxu0 %v1689
    %2324 = vmatpush1.bf16.msra.mxu0 %v1688
    %2325 = vmatprep.subr.bf16.mxu0 %v1685
    %2326 = vmatpush1.bf16.msra.mxu0 %v1684
    %2327 = vmatprep.subr.bf16.mxu0 %v1681
    %2328 = vmatpush1.bf16.msra.mxu0 %v1680
    %2329 = vmatprep.subr.bf16.mxu0 %v1677
    %2330 = vmatpush1.bf16.msra.mxu0 %v1676
    %2331 = vmatprep.subr.bf16.mxu0 %v1673
    %2332 = vmatpush1.bf16.msra.mxu0 %v1672
    %2333 = vmatprep.subr.bf16.mxu0 %v1669
    %2334 = vmatpush1.bf16.msra.mxu0 %v1668
    %2335 = vmatprep.subr.bf16.mxu0 %v1729
    %2336 = vmatpush2.bf16.msra.mxu0 %v1728
    %2337 = vmatprep.subr.bf16.mxu0 %v1725
    %2338 = vmatpush2.bf16.msra.mxu0 %v1724
    %2339 = vmatprep.subr.bf16.mxu0 %v1721
    %2340 = vmatpush2.bf16.msra.mxu0 %v1720
    %2341 = vmatprep.subr.bf16.mxu0 %v1717
    %2342 = vmatpush2.bf16.msra.mxu0 %v1716
    %2343 = vmatprep.subr.bf16.mxu0 %v1713
    %2344 = vmatpush2.bf16.msra.mxu0 %v1712
    %2345 = vmatprep.subr.bf16.mxu0 %v1709
    %2346 = vmatpush2.bf16.msra.mxu0 %v1708
    %2347 = vmatprep.subr.bf16.mxu0 %v1705
    %2348 = vmatpush2.bf16.msra.mxu0 %v1704
    %2349 = vmatprep.subr.bf16.mxu0 %v1701
    %2350 = vmatpush2.bf16.msra.mxu0 %v1700
    %2351 = vmatprep.mubr.bf16.mxu0 %v551
    %2352 = vmatmul.mubr.bf16.gmra.mxu0 %v550
    %v2353 = vpop.f32.mrf.mxu0
    %v2354 = vadd.f32 %v2313, %v2353
    %v2355 = vpop.f32.mrf.mxu0
    %v2356 = vadd.f32 %v2315, %v2355
    %v2357 = vpop.f32.mrf.mxu0
    %v2358 = vpop.f32.mrf.mxu0
    %2359 = vdwg.mxu0
    %2360 = vmatprep.subr.bf16.mxu0 %v1761
    %2361 = vmatpush1.bf16.msra.mxu0 %v1760
    %2362 = vmatprep.subr.bf16.mxu0 %v1757
    %2363 = vmatpush1.bf16.msra.mxu0 %v1756
    %2364 = vmatprep.subr.bf16.mxu0 %v1753
    %2365 = vmatpush1.bf16.msra.mxu0 %v1752
    %2366 = vmatprep.subr.bf16.mxu0 %v1749
    %2367 = vmatpush1.bf16.msra.mxu0 %v1748
    %2368 = vmatprep.subr.bf16.mxu0 %v1745
    %2369 = vmatpush1.bf16.msra.mxu0 %v1744
    %2370 = vmatprep.subr.bf16.mxu0 %v1741
    %2371 = vmatpush1.bf16.msra.mxu0 %v1740
    %2372 = vmatprep.subr.bf16.mxu0 %v1737
    %2373 = vmatpush1.bf16.msra.mxu0 %v1736
    %2374 = vmatprep.subr.bf16.mxu0 %v1733
    %2375 = vmatpush1.bf16.msra.mxu0 %v1732
    %2376 = vmatprep.subr.bf16.mxu0 %v1793
    %2377 = vmatpush2.bf16.msra.mxu0 %v1792
    %2378 = vmatprep.subr.bf16.mxu0 %v1789
    %2379 = vmatpush2.bf16.msra.mxu0 %v1788
    %2380 = vmatprep.subr.bf16.mxu0 %v1785
    %2381 = vmatpush2.bf16.msra.mxu0 %v1784
    %2382 = vmatprep.subr.bf16.mxu0 %v1781
    %2383 = vmatpush2.bf16.msra.mxu0 %v1780
    %2384 = vmatprep.subr.bf16.mxu0 %v1777
    %2385 = vmatpush2.bf16.msra.mxu0 %v1776
    %2386 = vmatprep.subr.bf16.mxu0 %v1773
    %2387 = vmatpush2.bf16.msra.mxu0 %v1772
    %2388 = vmatprep.subr.bf16.mxu0 %v1769
    %2389 = vmatpush2.bf16.msra.mxu0 %v1768
    %2390 = vmatprep.subr.bf16.mxu0 %v1765
    %2391 = vmatpush2.bf16.msra.mxu0 %v1764
    %2392 = vmatprep.mubr.bf16.mxu0 %v553
    %2393 = vmatmul.mubr.bf16.gmra.mxu0 %v552
    %v2394 = vpop.f32.mrf.mxu0
    %v2395 = vadd.f32 %v2354, %v2394
    %v2396 = vpop.f32.mrf.mxu0
    %v2397 = vadd.f32 %v2356, %v2396
    %v2398 = vpop.f32.mrf.mxu0
    %v2399 = vpop.f32.mrf.mxu0
    %2400 = vdwg.mxu0
    %2401 = vmatprep.subr.bf16.mxu0 %v1825
    %2402 = vmatpush1.bf16.msra.mxu0 %v1824
    %2403 = vmatprep.subr.bf16.mxu0 %v1821
    %2404 = vmatpush1.bf16.msra.mxu0 %v1820
    %2405 = vmatprep.subr.bf16.mxu0 %v1817
    %2406 = vmatpush1.bf16.msra.mxu0 %v1816
    %2407 = vmatprep.subr.bf16.mxu0 %v1813
    %2408 = vmatpush1.bf16.msra.mxu0 %v1812
    %2409 = vmatprep.subr.bf16.mxu0 %v1809
    %2410 = vmatpush1.bf16.msra.mxu0 %v1808
    %2411 = vmatprep.subr.bf16.mxu0 %v1805
    %2412 = vmatpush1.bf16.msra.mxu0 %v1804
    %2413 = vmatprep.subr.bf16.mxu0 %v1801
    %2414 = vmatpush1.bf16.msra.mxu0 %v1800
    %2415 = vmatprep.subr.bf16.mxu0 %v1797
    %2416 = vmatpush1.bf16.msra.mxu0 %v1796
    %2417 = vmatprep.subr.bf16.mxu0 %v1857
    %2418 = vmatpush2.bf16.msra.mxu0 %v1856
    %2419 = vmatprep.subr.bf16.mxu0 %v1853
    %2420 = vmatpush2.bf16.msra.mxu0 %v1852
    %2421 = vmatprep.subr.bf16.mxu0 %v1849
    %2422 = vmatpush2.bf16.msra.mxu0 %v1848
    %2423 = vmatprep.subr.bf16.mxu0 %v1845
    %2424 = vmatpush2.bf16.msra.mxu0 %v1844
    %2425 = vmatprep.subr.bf16.mxu0 %v1841
    %2426 = vmatpush2.bf16.msra.mxu0 %v1840
    %2427 = vmatprep.subr.bf16.mxu0 %v1837
    %2428 = vmatpush2.bf16.msra.mxu0 %v1836
    %2429 = vmatprep.subr.bf16.mxu0 %v1833
    %2430 = vmatpush2.bf16.msra.mxu0 %v1832
    %2431 = vmatprep.subr.bf16.mxu0 %v1829
    %2432 = vmatpush2.bf16.msra.mxu0 %v1828
    %2433 = vmatprep.mubr.bf16.mxu0 %v555
    %2434 = vmatmul.mubr.bf16.gmra.mxu0 %v554
    %v2435 = vpop.f32.mrf.mxu0
    %v2436 = vadd.f32 %v2395, %v2435
    %v2437 = vpop.f32.mrf.mxu0
    %v2438 = vadd.f32 %v2397, %v2437
    %v2439 = vpop.f32.mrf.mxu0
    %v2440 = vpop.f32.mrf.mxu0
    %2441 = vdwg.mxu0
    %v2442 = vmax.f32 %v2272, 0.0
    %v2443 = vmax.f32 %v2274, 0.0
    %v2444 = vmax.f32 %v2436, 0.0
    %v2445 = vmax.f32 %v2438, 0.0
    %v2446 = vpack.c.bf16 %v2442, %v2442
    %v2447 = vpack.c.bf16 %v2443, %v2443
    %v2448 = vpack.c.bf16 %v2444, %v2444
    %v2449 = vpack.c.bf16 %v2445, %v2445
    %v2450 = vld [vmem:[#allocation5 + $0xc] sm:$0x3]
    %v2451 = vld [vmem:[#allocation10] sm:$0xff]
    %v2452 = vld [vmem:[#allocation10 + $0x8] sm:$0xff]
    %v2453 = vld [vmem:[#allocation10 + $0x10] sm:$0xff]
    %v2454 = vld [vmem:[#allocation10 + $0x18] sm:$0xff]
    %v2455 = vld [vmem:[#allocation10 + $0x20] sm:$0xff]
    %v2456 = vld [vmem:[#allocation10 + $0x28] sm:$0xff]
    %v2457 = vld [vmem:[#allocation10 + $0x30] sm:$0xff]
    %v2458 = vld [vmem:[#allocation10 + $0x38] sm:$0xff]
    %v2459 = vld [vmem:[#allocation10 + $0x40] sm:$0xff]
    %v2460 = vld [vmem:[#allocation10 + $0x48] sm:$0xff]
    %v2461 = vld [vmem:[#allocation10 + $0x50] sm:$0xff]
    %v2462 = vld [vmem:[#allocation10 + $0x58] sm:$0xff]
    %v2463 = vld [vmem:[#allocation10 + $0x60] sm:$0xff]
    %v2464 = vld [vmem:[#allocation10 + $0x68] sm:$0xff]
    %v2465 = vld [vmem:[#allocation10 + $0x70] sm:$0xff]
    %v2466 = vld [vmem:[#allocation10 + $0x78] sm:$0xff]
    %v2467 = vld [vmem:[#allocation10 + $0x80] sm:$0xff]
    %v2468 = vld [vmem:[#allocation10 + $0x88] sm:$0xff]
    %v2469 = vld [vmem:[#allocation10 + $0x90] sm:$0xff]
    %v2470 = vld [vmem:[#allocation10 + $0x98] sm:$0xff]
    %v2471 = vld [vmem:[#allocation10 + $0xa0] sm:$0xff]
    %v2472 = vld [vmem:[#allocation10 + $0xa8] sm:$0xff]
    %v2473 = vld [vmem:[#allocation10 + $0xb0] sm:$0xff]
    %v2474 = vld [vmem:[#allocation10 + $0xb8] sm:$0xff]
    %v2475 = vld [vmem:[#allocation10 + $0xc0] sm:$0xff]
    %v2476 = vld [vmem:[#allocation10 + $0xc8] sm:$0xff]
    %v2477 = vld [vmem:[#allocation10 + $0xd0] sm:$0xff]
    %v2478 = vld [vmem:[#allocation10 + $0xd8] sm:$0xff]
    %v2479 = vld [vmem:[#allocation10 + $0xe0] sm:$0xff]
    %v2480 = vld [vmem:[#allocation10 + $0xe8] sm:$0xff]
    %v2481 = vld [vmem:[#allocation10 + $0xf0] sm:$0xff]
    %v2482 = vld [vmem:[#allocation10 + $0xf8] sm:$0xff]
    %v2483 = vld [vmem:[#allocation10 + $0x100] sm:$0xff]
    %v2484 = vld [vmem:[#allocation10 + $0x108] sm:$0xff]
    %v2485 = vld [vmem:[#allocation10 + $0x110] sm:$0xff]
    %v2486 = vld [vmem:[#allocation10 + $0x118] sm:$0xff]
    %v2487 = vld [vmem:[#allocation10 + $0x120] sm:$0xff]
    %v2488 = vld [vmem:[#allocation10 + $0x128] sm:$0xff]
    %v2489 = vld [vmem:[#allocation10 + $0x130] sm:$0xff]
    %v2490 = vld [vmem:[#allocation10 + $0x138] sm:$0xff]
    %v2491 = vld [vmem:[#allocation10 + $0x140] sm:$0xff]
    %v2492 = vld [vmem:[#allocation10 + $0x148] sm:$0xff]
    %v2493 = vld [vmem:[#allocation10 + $0x150] sm:$0xff]
    %v2494 = vld [vmem:[#allocation10 + $0x158] sm:$0xff]
    %v2495 = vld [vmem:[#allocation10 + $0x160] sm:$0xff]
    %v2496 = vld [vmem:[#allocation10 + $0x168] sm:$0xff]
    %v2497 = vld [vmem:[#allocation10 + $0x170] sm:$0xff]
    %v2498 = vld [vmem:[#allocation10 + $0x178] sm:$0xff]
    %v2499 = vld [vmem:[#allocation10 + $0x180] sm:$0xff]
    %v2500 = vld [vmem:[#allocation10 + $0x188] sm:$0xff]
    %v2501 = vld [vmem:[#allocation10 + $0x190] sm:$0xff]
    %v2502 = vld [vmem:[#allocation10 + $0x198] sm:$0xff]
    %v2503 = vld [vmem:[#allocation10 + $0x1a0] sm:$0xff]
    %v2504 = vld [vmem:[#allocation10 + $0x1a8] sm:$0xff]
    %v2505 = vld [vmem:[#allocation10 + $0x1b0] sm:$0xff]
    %v2506 = vld [vmem:[#allocation10 + $0x1b8] sm:$0xff]
    %v2507 = vld [vmem:[#allocation10 + $0x1c0] sm:$0xff]
    %v2508 = vld [vmem:[#allocation10 + $0x1c8] sm:$0xff]
    %v2509 = vld [vmem:[#allocation10 + $0x1d0] sm:$0xff]
    %v2510 = vld [vmem:[#allocation10 + $0x1d8] sm:$0xff]
    %v2511 = vld [vmem:[#allocation10 + $0x1e0] sm:$0xff]
    %v2512 = vld [vmem:[#allocation10 + $0x1e8] sm:$0xff]
    %v2513 = vld [vmem:[#allocation10 + $0x1f0] sm:$0xff]
    %v2514 = vld [vmem:[#allocation10 + $0x1f8] sm:$0xff]
    %v2516 = vlaneseq
    %v2517 = vshrl.u32 %v2516, 7
    %v2518 = vsub.s32 0, %v2517
    %v2519 = vrot.slane %v2450, %v2518
    %v2520 = vlaneseq
    %v2521 = vshrl.u32 %v2520, 7
    %v2522 = vsub.s32 1, %v2521
    %v2523 = vrot.slane %v2450, %v2522
    %v2590 = vunpack.c.l.b16 %v2451
    %v2591 = vunpack.c.h.b16 %v2451
    %v2592 = vunpack.c.l.b16 %v2452
    %v2593 = vunpack.c.h.b16 %v2452
    %v2594 = vunpack.c.l.b16 %v2453
    %v2595 = vunpack.c.h.b16 %v2453
    %v2596 = vunpack.c.l.b16 %v2454
    %v2597 = vunpack.c.h.b16 %v2454
    %v2598 = vunpack.c.l.b16 %v2455
    %v2599 = vunpack.c.h.b16 %v2455
    %v2600 = vunpack.c.l.b16 %v2456
    %v2601 = vunpack.c.h.b16 %v2456
    %v2602 = vunpack.c.l.b16 %v2457
    %v2603 = vunpack.c.h.b16 %v2457
    %v2604 = vunpack.c.l.b16 %v2458
    %v2605 = vunpack.c.h.b16 %v2458
    %v2606 = vunpack.c.l.b16 %v2459
    %v2607 = vunpack.c.h.b16 %v2459
    %v2608 = vunpack.c.l.b16 %v2460
    %v2609 = vunpack.c.h.b16 %v2460
    %v2610 = vunpack.c.l.b16 %v2461
    %v2611 = vunpack.c.h.b16 %v2461
    %v2612 = vunpack.c.l.b16 %v2462
    %v2613 = vunpack.c.h.b16 %v2462
    %v2614 = vunpack.c.l.b16 %v2463
    %v2615 = vunpack.c.h.b16 %v2463
    %v2616 = vunpack.c.l.b16 %v2464
    %v2617 = vunpack.c.h.b16 %v2464
    %v2618 = vunpack.c.l.b16 %v2465
    %v2619 = vunpack.c.h.b16 %v2465
    %v2620 = vunpack.c.l.b16 %v2466
    %v2621 = vunpack.c.h.b16 %v2466
    %v2622 = vunpack.c.l.b16 %v2467
    %v2623 = vunpack.c.h.b16 %v2467
    %v2624 = vunpack.c.l.b16 %v2468
    %v2625 = vunpack.c.h.b16 %v2468
    %v2626 = vunpack.c.l.b16 %v2469
    %v2627 = vunpack.c.h.b16 %v2469
    %v2628 = vunpack.c.l.b16 %v2470
    %v2629 = vunpack.c.h.b16 %v2470
    %v2630 = vunpack.c.l.b16 %v2471
    %v2631 = vunpack.c.h.b16 %v2471
    %v2632 = vunpack.c.l.b16 %v2472
    %v2633 = vunpack.c.h.b16 %v2472
    %v2634 = vunpack.c.l.b16 %v2473
    %v2635 = vunpack.c.h.b16 %v2473
    %v2636 = vunpack.c.l.b16 %v2474
    %v2637 = vunpack.c.h.b16 %v2474
    %v2638 = vunpack.c.l.b16 %v2475
    %v2639 = vunpack.c.h.b16 %v2475
    %v2640 = vunpack.c.l.b16 %v2476
    %v2641 = vunpack.c.h.b16 %v2476
    %v2642 = vunpack.c.l.b16 %v2477
    %v2643 = vunpack.c.h.b16 %v2477
    %v2644 = vunpack.c.l.b16 %v2478
    %v2645 = vunpack.c.h.b16 %v2478
    %v2646 = vunpack.c.l.b16 %v2479
    %v2647 = vunpack.c.h.b16 %v2479
    %v2648 = vunpack.c.l.b16 %v2480
    %v2649 = vunpack.c.h.b16 %v2480
    %v2650 = vunpack.c.l.b16 %v2481
    %v2651 = vunpack.c.h.b16 %v2481
    %v2652 = vunpack.c.l.b16 %v2482
    %v2653 = vunpack.c.h.b16 %v2482
    %v2654 = vunpack.c.l.b16 %v2483
    %v2655 = vunpack.c.h.b16 %v2483
    %v2656 = vunpack.c.l.b16 %v2484
    %v2657 = vunpack.c.h.b16 %v2484
    %v2658 = vunpack.c.l.b16 %v2485
    %v2659 = vunpack.c.h.b16 %v2485
    %v2660 = vunpack.c.l.b16 %v2486
    %v2661 = vunpack.c.h.b16 %v2486
    %v2662 = vunpack.c.l.b16 %v2487
    %v2663 = vunpack.c.h.b16 %v2487
    %v2664 = vunpack.c.l.b16 %v2488
    %v2665 = vunpack.c.h.b16 %v2488
    %v2666 = vunpack.c.l.b16 %v2489
    %v2667 = vunpack.c.h.b16 %v2489
    %v2668 = vunpack.c.l.b16 %v2490
    %v2669 = vunpack.c.h.b16 %v2490
    %v2670 = vunpack.c.l.b16 %v2491
    %v2671 = vunpack.c.h.b16 %v2491
    %v2672 = vunpack.c.l.b16 %v2492
    %v2673 = vunpack.c.h.b16 %v2492
    %v2674 = vunpack.c.l.b16 %v2493
    %v2675 = vunpack.c.h.b16 %v2493
    %v2676 = vunpack.c.l.b16 %v2494
    %v2677 = vunpack.c.h.b16 %v2494
    %v2678 = vunpack.c.l.b16 %v2495
    %v2679 = vunpack.c.h.b16 %v2495
    %v2680 = vunpack.c.l.b16 %v2496
    %v2681 = vunpack.c.h.b16 %v2496
    %v2682 = vunpack.c.l.b16 %v2497
    %v2683 = vunpack.c.h.b16 %v2497
    %v2684 = vunpack.c.l.b16 %v2498
    %v2685 = vunpack.c.h.b16 %v2498
    %v2686 = vunpack.c.l.b16 %v2499
    %v2687 = vunpack.c.h.b16 %v2499
    %v2688 = vunpack.c.l.b16 %v2500
    %v2689 = vunpack.c.h.b16 %v2500
    %v2690 = vunpack.c.l.b16 %v2501
    %v2691 = vunpack.c.h.b16 %v2501
    %v2692 = vunpack.c.l.b16 %v2502
    %v2693 = vunpack.c.h.b16 %v2502
    %v2694 = vunpack.c.l.b16 %v2503
    %v2695 = vunpack.c.h.b16 %v2503
    %v2696 = vunpack.c.l.b16 %v2504
    %v2697 = vunpack.c.h.b16 %v2504
    %v2698 = vunpack.c.l.b16 %v2505
    %v2699 = vunpack.c.h.b16 %v2505
    %v2700 = vunpack.c.l.b16 %v2506
    %v2701 = vunpack.c.h.b16 %v2506
    %v2702 = vunpack.c.l.b16 %v2507
    %v2703 = vunpack.c.h.b16 %v2507
    %v2704 = vunpack.c.l.b16 %v2508
    %v2705 = vunpack.c.h.b16 %v2508
    %v2706 = vunpack.c.l.b16 %v2509
    %v2707 = vunpack.c.h.b16 %v2509
    %v2708 = vunpack.c.l.b16 %v2510
    %v2709 = vunpack.c.h.b16 %v2510
    %v2710 = vunpack.c.l.b16 %v2511
    %v2711 = vunpack.c.h.b16 %v2511
    %v2712 = vunpack.c.l.b16 %v2512
    %v2713 = vunpack.c.h.b16 %v2512
    %v2714 = vunpack.c.l.b16 %v2513
    %v2715 = vunpack.c.h.b16 %v2513
    %v2716 = vunpack.c.l.b16 %v2514
    %v2717 = vunpack.c.h.b16 %v2514
    %v2718 = vpack.c.b16 %v2592, %v2590
    %v2719 = vpack.c.b16 %v2593, %v2591
    %v2720 = vpack.c.b16 %v2596, %v2594
    %v2721 = vpack.c.b16 %v2597, %v2595
    %v2722 = vpack.c.b16 %v2600, %v2598
    %v2723 = vpack.c.b16 %v2601, %v2599
    %v2724 = vpack.c.b16 %v2604, %v2602
    %v2725 = vpack.c.b16 %v2605, %v2603
    %v2726 = vpack.c.b16 %v2608, %v2606
    %v2727 = vpack.c.b16 %v2609, %v2607
    %v2728 = vpack.c.b16 %v2612, %v2610
    %v2729 = vpack.c.b16 %v2613, %v2611
    %v2730 = vpack.c.b16 %v2616, %v2614
    %v2731 = vpack.c.b16 %v2617, %v2615
    %v2732 = vpack.c.b16 %v2620, %v2618
    %v2733 = vpack.c.b16 %v2621, %v2619
    %v2734 = vpack.c.b16 %v2624, %v2622
    %v2735 = vpack.c.b16 %v2625, %v2623
    %v2736 = vpack.c.b16 %v2628, %v2626
    %v2737 = vpack.c.b16 %v2629, %v2627
    %v2738 = vpack.c.b16 %v2632, %v2630
    %v2739 = vpack.c.b16 %v2633, %v2631
    %v2740 = vpack.c.b16 %v2636, %v2634
    %v2741 = vpack.c.b16 %v2637, %v2635
    %v2742 = vpack.c.b16 %v2640, %v2638
    %v2743 = vpack.c.b16 %v2641, %v2639
    %v2744 = vpack.c.b16 %v2644, %v2642
    %v2745 = vpack.c.b16 %v2645, %v2643
    %v2746 = vpack.c.b16 %v2648, %v2646
    %v2747 = vpack.c.b16 %v2649, %v2647
    %v2748 = vpack.c.b16 %v2652, %v2650
    %v2749 = vpack.c.b16 %v2653, %v2651
    %v2750 = vpack.c.b16 %v2656, %v2654
    %v2751 = vpack.c.b16 %v2657, %v2655
    %v2752 = vpack.c.b16 %v2660, %v2658
    %v2753 = vpack.c.b16 %v2661, %v2659
    %v2754 = vpack.c.b16 %v2664, %v2662
    %v2755 = vpack.c.b16 %v2665, %v2663
    %v2756 = vpack.c.b16 %v2668, %v2666
    %v2757 = vpack.c.b16 %v2669, %v2667
    %v2758 = vpack.c.b16 %v2672, %v2670
    %v2759 = vpack.c.b16 %v2673, %v2671
    %v2760 = vpack.c.b16 %v2676, %v2674
    %v2761 = vpack.c.b16 %v2677, %v2675
    %v2762 = vpack.c.b16 %v2680, %v2678
    %v2763 = vpack.c.b16 %v2681, %v2679
    %v2764 = vpack.c.b16 %v2684, %v2682
    %v2765 = vpack.c.b16 %v2685, %v2683
    %v2766 = vpack.c.b16 %v2688, %v2686
    %v2767 = vpack.c.b16 %v2689, %v2687
    %v2768 = vpack.c.b16 %v2692, %v2690
    %v2769 = vpack.c.b16 %v2693, %v2691
    %v2770 = vpack.c.b16 %v2696, %v2694
    %v2771 = vpack.c.b16 %v2697, %v2695
    %v2772 = vpack.c.b16 %v2700, %v2698
    %v2773 = vpack.c.b16 %v2701, %v2699
    %v2774 = vpack.c.b16 %v2704, %v2702
    %v2775 = vpack.c.b16 %v2705, %v2703
    %v2776 = vpack.c.b16 %v2708, %v2706
    %v2777 = vpack.c.b16 %v2709, %v2707
    %v2778 = vpack.c.b16 %v2712, %v2710
    %v2779 = vpack.c.b16 %v2713, %v2711
    %v2780 = vpack.c.b16 %v2716, %v2714
    %v2781 = vpack.c.b16 %v2717, %v2715
    %2846 = vmatprep.subr.bf16.mxu0 %v2733
    %2847 = vmatpush1.bf16.msra.mxu0 %v2732
    %2848 = vmatprep.subr.bf16.mxu0 %v2731
    %2849 = vmatpush1.bf16.msra.mxu0 %v2730
    %2850 = vmatprep.subr.bf16.mxu0 %v2729
    %2851 = vmatpush1.bf16.msra.mxu0 %v2728
    %2852 = vmatprep.subr.bf16.mxu0 %v2727
    %2853 = vmatpush1.bf16.msra.mxu0 %v2726
    %2854 = vmatprep.subr.bf16.mxu0 %v2725
    %2855 = vmatpush1.bf16.msra.mxu0 %v2724
    %2856 = vmatprep.subr.bf16.mxu0 %v2723
    %2857 = vmatpush1.bf16.msra.mxu0 %v2722
    %2858 = vmatprep.subr.bf16.mxu0 %v2721
    %2859 = vmatpush1.bf16.msra.mxu0 %v2720
    %2860 = vmatprep.subr.bf16.mxu0 %v2719
    %2861 = vmatpush1.bf16.msra.mxu0 %v2718
    %2862 = vmatprep.subr.bf16.mxu0 %v2749
    %2863 = vmatpush2.bf16.msra.mxu0 %v2748
    %2864 = vmatprep.subr.bf16.mxu0 %v2747
    %2865 = vmatpush2.bf16.msra.mxu0 %v2746
    %2866 = vmatprep.subr.bf16.mxu0 %v2745
    %2867 = vmatpush2.bf16.msra.mxu0 %v2744
    %2868 = vmatprep.subr.bf16.mxu0 %v2743
    %2869 = vmatpush2.bf16.msra.mxu0 %v2742
    %2870 = vmatprep.subr.bf16.mxu0 %v2741
    %2871 = vmatpush2.bf16.msra.mxu0 %v2740
    %2872 = vmatprep.subr.bf16.mxu0 %v2739
    %2873 = vmatpush2.bf16.msra.mxu0 %v2738
    %2874 = vmatprep.subr.bf16.mxu0 %v2737
    %2875 = vmatpush2.bf16.msra.mxu0 %v2736
    %2876 = vmatprep.subr.bf16.mxu0 %v2735
    %2877 = vmatpush2.bf16.msra.mxu0 %v2734
    %2878 = vmatprep.mubr.bf16.mxu0 %v2447
    %2879 = vmatmul.mubr.bf16.gmra.mxu0 %v2446
    %v2880 = vpop.f32.mrf.mxu0
    %v2881 = vadd.f32 %v2519, %v2880
    %v2882 = vpop.f32.mrf.mxu0
    %v2883 = vadd.f32 %v2523, %v2882
    %v2884 = vpop.f32.mrf.mxu0
    %v2885 = vpop.f32.mrf.mxu0
    %2886 = vdwg.mxu0
    %2887 = vmatprep.subr.bf16.mxu0 %v2765
    %2888 = vmatpush1.bf16.msra.mxu0 %v2764
    %2889 = vmatprep.subr.bf16.mxu0 %v2763
    %2890 = vmatpush1.bf16.msra.mxu0 %v2762
    %2891 = vmatprep.subr.bf16.mxu0 %v2761
    %2892 = vmatpush1.bf16.msra.mxu0 %v2760
    %2893 = vmatprep.subr.bf16.mxu0 %v2759
    %2894 = vmatpush1.bf16.msra.mxu0 %v2758
    %2895 = vmatprep.subr.bf16.mxu0 %v2757
    %2896 = vmatpush1.bf16.msra.mxu0 %v2756
    %2897 = vmatprep.subr.bf16.mxu0 %v2755
    %2898 = vmatpush1.bf16.msra.mxu0 %v2754
    %2899 = vmatprep.subr.bf16.mxu0 %v2753
    %2900 = vmatpush1.bf16.msra.mxu0 %v2752
    %2901 = vmatprep.subr.bf16.mxu0 %v2751
    %2902 = vmatpush1.bf16.msra.mxu0 %v2750
    %2903 = vmatprep.subr.bf16.mxu0 %v2781
    %2904 = vmatpush2.bf16.msra.mxu0 %v2780
    %2905 = vmatprep.subr.bf16.mxu0 %v2779
    %2906 = vmatpush2.bf16.msra.mxu0 %v2778
    %2907 = vmatprep.subr.bf16.mxu0 %v2777
    %2908 = vmatpush2.bf16.msra.mxu0 %v2776
    %2909 = vmatprep.subr.bf16.mxu0 %v2775
    %2910 = vmatpush2.bf16.msra.mxu0 %v2774
    %2911 = vmatprep.subr.bf16.mxu0 %v2773
    %2912 = vmatpush2.bf16.msra.mxu0 %v2772
    %2913 = vmatprep.subr.bf16.mxu0 %v2771
    %2914 = vmatpush2.bf16.msra.mxu0 %v2770
    %2915 = vmatprep.subr.bf16.mxu0 %v2769
    %2916 = vmatpush2.bf16.msra.mxu0 %v2768
    %2917 = vmatprep.subr.bf16.mxu0 %v2767
    %2918 = vmatpush2.bf16.msra.mxu0 %v2766
    %2919 = vmatprep.mubr.bf16.mxu0 %v2449
    %2920 = vmatmul.mubr.bf16.gmra.mxu0 %v2448
    %v2921 = vpop.f32.mrf.mxu0
    %v2922 = vadd.f32 %v2881, %v2921
    %v2923 = vpop.f32.mrf.mxu0
    %v2924 = vadd.f32 %v2883, %v2923
    %v2925 = vpop.f32.mrf.mxu0
    %v2926 = vpop.f32.mrf.mxu0
    %2927 = vdwg.mxu0
    %v2928 = vmax.f32 %v2922, 0.0
    %v2929 = vmax.f32 %v2924, 0.0
    %v2930 = vpack.c.bf16 %v2928, %v2928
    %v2931 = vpack.c.bf16 %v2929, %v2929
    %v2932 = vld [vmem:[#allocation5 + $0xe] sm:$0x1]
    %v2933 = vld [vmem:[#allocation11] sm:$0xf]
    %v2934 = vld [vmem:[#allocation11 + $0x4] sm:$0xf]
    %v2935 = vld [vmem:[#allocation11 + $0x8] sm:$0xf]
    %v2936 = vld [vmem:[#allocation11 + $0xc] sm:$0xf]
    %v2937 = vld [vmem:[#allocation11 + $0x10] sm:$0xf]
    %v2938 = vld [vmem:[#allocation11 + $0x14] sm:$0xf]
    %v2939 = vld [vmem:[#allocation11 + $0x18] sm:$0xf]
    %v2940 = vld [vmem:[#allocation11 + $0x1c] sm:$0xf]
    %v2941 = vld [vmem:[#allocation11 + $0x20] sm:$0xf]
    %v2942 = vld [vmem:[#allocation11 + $0x24] sm:$0xf]
    %v2943 = vld [vmem:[#allocation11 + $0x28] sm:$0xf]
    %v2944 = vld [vmem:[#allocation11 + $0x2c] sm:$0xf]
    %v2945 = vld [vmem:[#allocation11 + $0x30] sm:$0xf]
    %v2946 = vld [vmem:[#allocation11 + $0x34] sm:$0xf]
    %v2947 = vld [vmem:[#allocation11 + $0x38] sm:$0xf]
    %v2948 = vld [vmem:[#allocation11 + $0x3c] sm:$0xf]
    %v2949 = vld [vmem:[#allocation11 + $0x40] sm:$0xf]
    %v2950 = vld [vmem:[#allocation11 + $0x44] sm:$0xf]
    %v2951 = vld [vmem:[#allocation11 + $0x48] sm:$0xf]
    %v2952 = vld [vmem:[#allocation11 + $0x4c] sm:$0xf]
    %v2953 = vld [vmem:[#allocation11 + $0x50] sm:$0xf]
    %v2954 = vld [vmem:[#allocation11 + $0x54] sm:$0xf]
    %v2955 = vld [vmem:[#allocation11 + $0x58] sm:$0xf]
    %v2956 = vld [vmem:[#allocation11 + $0x5c] sm:$0xf]
    %v2957 = vld [vmem:[#allocation11 + $0x60] sm:$0xf]
    %v2958 = vld [vmem:[#allocation11 + $0x64] sm:$0xf]
    %v2959 = vld [vmem:[#allocation11 + $0x68] sm:$0xf]
    %v2960 = vld [vmem:[#allocation11 + $0x6c] sm:$0xf]
    %v2961 = vld [vmem:[#allocation11 + $0x70] sm:$0xf]
    %v2962 = vld [vmem:[#allocation11 + $0x74] sm:$0xf]
    %v2963 = vld [vmem:[#allocation11 + $0x78] sm:$0xf]
    %v2964 = vld [vmem:[#allocation11 + $0x7c] sm:$0xf]
    %v2966 = vlaneseq
    %v2967 = vshrl.u32 %v2966, 7
    %v2968 = vsub.s32 0, %v2967
    %v2969 = vrot.slane %v2932, %v2968
    %v3003 = vunpack.c.l.b16 %v2933
    %v3004 = vunpack.c.l.b16 %v2934
    %v3005 = vunpack.c.l.b16 %v2935
    %v3006 = vunpack.c.l.b16 %v2936
    %v3007 = vunpack.c.l.b16 %v2937
    %v3008 = vunpack.c.l.b16 %v2938
    %v3009 = vunpack.c.l.b16 %v2939
    %v3010 = vunpack.c.l.b16 %v2940
    %v3011 = vunpack.c.l.b16 %v2941
    %v3012 = vunpack.c.l.b16 %v2942
    %v3013 = vunpack.c.l.b16 %v2943
    %v3014 = vunpack.c.l.b16 %v2944
    %v3015 = vunpack.c.l.b16 %v2945
    %v3016 = vunpack.c.l.b16 %v2946
    %v3017 = vunpack.c.l.b16 %v2947
    %v3018 = vunpack.c.l.b16 %v2948
    %v3019 = vunpack.c.l.b16 %v2949
    %v3020 = vunpack.c.l.b16 %v2950
    %v3021 = vunpack.c.l.b16 %v2951
    %v3022 = vunpack.c.l.b16 %v2952
    %v3023 = vunpack.c.l.b16 %v2953
    %v3024 = vunpack.c.l.b16 %v2954
    %v3025 = vunpack.c.l.b16 %v2955
    %v3026 = vunpack.c.l.b16 %v2956
    %v3027 = vunpack.c.l.b16 %v2957
    %v3028 = vunpack.c.l.b16 %v2958
    %v3029 = vunpack.c.l.b16 %v2959
    %v3030 = vunpack.c.l.b16 %v2960
    %v3031 = vunpack.c.l.b16 %v2961
    %v3032 = vunpack.c.l.b16 %v2962
    %v3033 = vunpack.c.l.b16 %v2963
    %v3034 = vunpack.c.l.b16 %v2964
    %v3035 = vpack.c.b16 %v3004, %v3003
    %v3036 = vpack.c.b16 %v3006, %v3005
    %v3037 = vpack.c.b16 %v3008, %v3007
    %v3038 = vpack.c.b16 %v3010, %v3009
    %v3039 = vpack.c.b16 %v3012, %v3011
    %v3040 = vpack.c.b16 %v3014, %v3013
    %v3041 = vpack.c.b16 %v3016, %v3015
    %v3042 = vpack.c.b16 %v3018, %v3017
    %v3043 = vpack.c.b16 %v3020, %v3019
    %v3044 = vpack.c.b16 %v3022, %v3021
    %v3045 = vpack.c.b16 %v3024, %v3023
    %v3046 = vpack.c.b16 %v3026, %v3025
    %v3047 = vpack.c.b16 %v3028, %v3027
    %v3048 = vpack.c.b16 %v3030, %v3029
    %v3049 = vpack.c.b16 %v3032, %v3031
    %v3050 = vpack.c.b16 %v3034, %v3033
    %3067 = vmatprep.subr.bf16.mxu0 0
    %3068 = vmatpush1.bf16.msra.mxu0 %v3042
    %3069 = vmatprep.subr.bf16.mxu0 0
    %3070 = vmatpush1.bf16.msra.mxu0 %v3041
    %3071 = vmatprep.subr.bf16.mxu0 0
    %3072 = vmatpush1.bf16.msra.mxu0 %v3040
    %3073 = vmatprep.subr.bf16.mxu0 0
    %3074 = vmatpush1.bf16.msra.mxu0 %v3039
    %3075 = vmatprep.subr.bf16.mxu0 0
    %3076 = vmatpush1.bf16.msra.mxu0 %v3038
    %3077 = vmatprep.subr.bf16.mxu0 0
    %3078 = vmatpush1.bf16.msra.mxu0 %v3037
    %3079 = vmatprep.subr.bf16.mxu0 0
    %3080 = vmatpush1.bf16.msra.mxu0 %v3036
    %3081 = vmatprep.subr.bf16.mxu0 0
    %3082 = vmatpush1.bf16.msra.mxu0 %v3035
    %3083 = vmatprep.subr.bf16.mxu0 0
    %3084 = vmatpush2.bf16.msra.mxu0 %v3050
    %3085 = vmatprep.subr.bf16.mxu0 0
    %3086 = vmatpush2.bf16.msra.mxu0 %v3049
    %3087 = vmatprep.subr.bf16.mxu0 0
    %3088 = vmatpush2.bf16.msra.mxu0 %v3048
    %3089 = vmatprep.subr.bf16.mxu0 0
    %3090 = vmatpush2.bf16.msra.mxu0 %v3047
    %3091 = vmatprep.subr.bf16.mxu0 0
    %3092 = vmatpush2.bf16.msra.mxu0 %v3046
    %3093 = vmatprep.subr.bf16.mxu0 0
    %3094 = vmatpush2.bf16.msra.mxu0 %v3045
    %3095 = vmatprep.subr.bf16.mxu0 0
    %3096 = vmatpush2.bf16.msra.mxu0 %v3044
    %3097 = vmatprep.subr.bf16.mxu0 0
    %3098 = vmatpush2.bf16.msra.mxu0 %v3043
    %3099 = vmatprep.mubr.bf16.mxu0 %v2931
    %3100 = vmatmul.mubr.bf16.gmra.mxu0 %v2930
    %v3101 = vpop.f32.mrf.mxu0
    %v3102 = vadd.f32 %v2969, %v3101
    %v3103 = vpop.f32.mrf.mxu0
    %v3104 = vpop.f32.mrf.mxu0
    %v3105 = vpop.f32.mrf.mxu0
    %3106 = vdwg.mxu0
    %v3107 = vmax.f32 %v3102, 0.0
    %v3108 = vpack.c.bf16 %v3107, %v3107
    %v3109 = vld [vmem:[#allocation5 + $0xf] sm:$0x1]
    %v3110 = vld [vmem:[#allocation13] sm:$0xf]
    %v3111 = vld [vmem:[#allocation13 + $0x4] sm:$0xf]
    %v3112 = vld [vmem:[#allocation13 + $0x8] sm:$0xf]
    %v3113 = vld [vmem:[#allocation13 + $0xc] sm:$0xf]
    %v3114 = vld [vmem:[#allocation13 + $0x10] sm:$0xf]
    %v3115 = vld [vmem:[#allocation13 + $0x14] sm:$0xf]
    %v3116 = vld [vmem:[#allocation13 + $0x18] sm:$0xf]
    %v3117 = vld [vmem:[#allocation13 + $0x1c] sm:$0xf]
    %v3118 = vld [vmem:[#allocation13 + $0x20] sm:$0xf]
    %v3119 = vld [vmem:[#allocation13 + $0x24] sm:$0xf]
    %v3120 = vld [vmem:[#allocation13 + $0x28] sm:$0xf]
    %v3121 = vld [vmem:[#allocation13 + $0x2c] sm:$0xf]
    %v3122 = vld [vmem:[#allocation13 + $0x30] sm:$0xf]
    %v3123 = vld [vmem:[#allocation13 + $0x34] sm:$0xf]
    %v3124 = vld [vmem:[#allocation13 + $0x38] sm:$0xf]
    %v3125 = vld [vmem:[#allocation13 + $0x3c] sm:$0xf]
    %v3127 = vlaneseq
    %v3128 = vshrl.u32 %v3127, 7
    %v3129 = vsub.s32 0, %v3128
    %v3130 = vrot.slane %v3109, %v3129
    %v3148 = vunpack.c.l.b16 %v3110
    %v3149 = vunpack.c.l.b16 %v3111
    %v3150 = vunpack.c.l.b16 %v3112
    %v3151 = vunpack.c.l.b16 %v3113
    %v3152 = vunpack.c.l.b16 %v3114
    %v3153 = vunpack.c.l.b16 %v3115
    %v3154 = vunpack.c.l.b16 %v3116
    %v3155 = vunpack.c.l.b16 %v3117
    %v3156 = vunpack.c.l.b16 %v3118
    %v3157 = vunpack.c.l.b16 %v3119
    %v3158 = vunpack.c.l.b16 %v3120
    %v3159 = vunpack.c.l.b16 %v3121
    %v3160 = vunpack.c.l.b16 %v3122
    %v3161 = vunpack.c.l.b16 %v3123
    %v3162 = vunpack.c.l.b16 %v3124
    %v3163 = vunpack.c.l.b16 %v3125
    %v3164 = vpack.c.b16 %v3149, %v3148
    %v3165 = vpack.c.b16 %v3151, %v3150
    %v3166 = vpack.c.b16 %v3153, %v3152
    %v3167 = vpack.c.b16 %v3155, %v3154
    %v3168 = vpack.c.b16 %v3157, %v3156
    %v3169 = vpack.c.b16 %v3159, %v3158
    %v3170 = vpack.c.b16 %v3161, %v3160
    %v3171 = vpack.c.b16 %v3163, %v3162
    %3180 = vmatprep.subr.bf16.mxu0 0
    %3181 = vmatpush1.bf16.msra.mxu0 %v3171
    %3182 = vmatprep.subr.bf16.mxu0 0
    %3183 = vmatpush1.bf16.msra.mxu0 %v3170
    %3184 = vmatprep.subr.bf16.mxu0 0
    %3185 = vmatpush1.bf16.msra.mxu0 %v3169
    %3186 = vmatprep.subr.bf16.mxu0 0
    %3187 = vmatpush1.bf16.msra.mxu0 %v3168
    %3188 = vmatprep.subr.bf16.mxu0 0
    %3189 = vmatpush1.bf16.msra.mxu0 %v3167
    %3190 = vmatprep.subr.bf16.mxu0 0
    %3191 = vmatpush1.bf16.msra.mxu0 %v3166
    %3192 = vmatprep.subr.bf16.mxu0 0
    %3193 = vmatpush1.bf16.msra.mxu0 %v3165
    %3194 = vmatprep.subr.bf16.mxu0 0
    %3195 = vmatpush1.bf16.msra.mxu0 %v3164
    %3196 = vmatprep.subr.bf16.mxu0 0
    %3197 = vmatpush2.bf16.msra.mxu0 0
    %3198 = vmatprep.subr.bf16.mxu0 0
    %3199 = vmatpush2.bf16.msra.mxu0 0
    %3200 = vmatprep.subr.bf16.mxu0 0
    %3201 = vmatpush2.bf16.msra.mxu0 0
    %3202 = vmatprep.subr.bf16.mxu0 0
    %3203 = vmatpush2.bf16.msra.mxu0 0
    %3204 = vmatprep.subr.bf16.mxu0 0
    %3205 = vmatpush2.bf16.msra.mxu0 0
    %3206 = vmatprep.subr.bf16.mxu0 0
    %3207 = vmatpush2.bf16.msra.mxu0 0
    %3208 = vmatprep.subr.bf16.mxu0 0
    %3209 = vmatpush2.bf16.msra.mxu0 0
    %3210 = vmatprep.subr.bf16.mxu0 0
    %3211 = vmatpush2.bf16.msra.mxu0 0
    %3212 = vmatprep.mubr.bf16.mxu0 0
    %3213 = vmatmul.mubr.bf16.gmra.mxu0 %v3108
    %v3214 = vpop.f32.mrf.mxu0
    %v3215 = vadd.f32 %v3130, %v3214
    %v3216 = vpop.f32.mrf.mxu0
    %v3217 = vpop.f32.mrf.mxu0
    %v3218 = vpop.f32.mrf.mxu0
    %3219 = vdwg.mxu0
    %v3220 = vmax.f32 %v3215, 0.0
    %v3221 = vpack.c.bf16 %v3220, %v3220
    %v3222 = vld [vmem:[#allocation5 + $0x10] sm:$0x1]
    %v3223 = vld [vmem:[#allocation14] sm:$0xf]
    %v3224 = vld [vmem:[#allocation14 + $0x4] sm:$0xf]
    %v3225 = vld [vmem:[#allocation14 + $0x8] sm:$0xf]
    %v3226 = vld [vmem:[#allocation14 + $0xc] sm:$0xf]
    %v3227 = vld [vmem:[#allocation14 + $0x10] sm:$0xf]
    %v3228 = vld [vmem:[#allocation14 + $0x14] sm:$0xf]
    %v3229 = vld [vmem:[#allocation14 + $0x18] sm:$0xf]
    %v3230 = vld [vmem:[#allocation14 + $0x1c] sm:$0xf]
    %v3231 = vld [vmem:[#allocation14 + $0x20] sm:$0xf]
    %v3232 = vld [vmem:[#allocation14 + $0x24] sm:$0xf]
    %v3233 = vld [vmem:[#allocation14 + $0x28] sm:$0xf]
    %v3234 = vld [vmem:[#allocation14 + $0x2c] sm:$0xf]
    %v3235 = vld [vmem:[#allocation14 + $0x30] sm:$0xf]
    %v3236 = vld [vmem:[#allocation14 + $0x34] sm:$0xf]
    %v3237 = vld [vmem:[#allocation14 + $0x38] sm:$0xf]
    %v3238 = vld [vmem:[#allocation14 + $0x3c] sm:$0xf]
    %v3240 = vlaneseq
    %v3241 = vshrl.u32 %v3240, 7
    %v3242 = vsub.s32 0, %v3241
    %v3243 = vrot.slane %v3222, %v3242
    %v3261 = vunpack.c.l.b16 %v3223
    %v3262 = vunpack.c.l.b16 %v3224
    %v3263 = vunpack.c.l.b16 %v3225
    %v3264 = vunpack.c.l.b16 %v3226
    %v3265 = vunpack.c.l.b16 %v3227
    %v3266 = vunpack.c.l.b16 %v3228
    %v3267 = vunpack.c.l.b16 %v3229
    %v3268 = vunpack.c.l.b16 %v3230
    %v3269 = vunpack.c.l.b16 %v3231
    %v3270 = vunpack.c.l.b16 %v3232
    %v3271 = vunpack.c.l.b16 %v3233
    %v3272 = vunpack.c.l.b16 %v3234
    %v3273 = vunpack.c.l.b16 %v3235
    %v3274 = vunpack.c.l.b16 %v3236
    %v3275 = vunpack.c.l.b16 %v3237
    %v3276 = vunpack.c.l.b16 %v3238
    %v3277 = vpack.c.b16 %v3262, %v3261
    %v3278 = vpack.c.b16 %v3264, %v3263
    %v3279 = vpack.c.b16 %v3266, %v3265
    %v3280 = vpack.c.b16 %v3268, %v3267
    %v3281 = vpack.c.b16 %v3270, %v3269
    %v3282 = vpack.c.b16 %v3272, %v3271
    %v3283 = vpack.c.b16 %v3274, %v3273
    %v3284 = vpack.c.b16 %v3276, %v3275
    %3293 = vmatprep.subr.bf16.mxu0 0
    %3294 = vmatpush1.bf16.msra.mxu0 %v3284
    %3295 = vmatprep.subr.bf16.mxu0 0
    %3296 = vmatpush1.bf16.msra.mxu0 %v3283
    %3297 = vmatprep.subr.bf16.mxu0 0
    %3298 = vmatpush1.bf16.msra.mxu0 %v3282
    %3299 = vmatprep.subr.bf16.mxu0 0
    %3300 = vmatpush1.bf16.msra.mxu0 %v3281
    %3301 = vmatprep.subr.bf16.mxu0 0
    %3302 = vmatpush1.bf16.msra.mxu0 %v3280
    %3303 = vmatprep.subr.bf16.mxu0 0
    %3304 = vmatpush1.bf16.msra.mxu0 %v3279
    %3305 = vmatprep.subr.bf16.mxu0 0
    %3306 = vmatpush1.bf16.msra.mxu0 %v3278
    %3307 = vmatprep.subr.bf16.mxu0 0
    %3308 = vmatpush1.bf16.msra.mxu0 %v3277
    %3309 = vmatprep.subr.bf16.mxu0 0
    %3310 = vmatpush2.bf16.msra.mxu0 0
    %3311 = vmatprep.subr.bf16.mxu0 0
    %3312 = vmatpush2.bf16.msra.mxu0 0
    %3313 = vmatprep.subr.bf16.mxu0 0
    %3314 = vmatpush2.bf16.msra.mxu0 0
    %3315 = vmatprep.subr.bf16.mxu0 0
    %3316 = vmatpush2.bf16.msra.mxu0 0
    %3317 = vmatprep.subr.bf16.mxu0 0
    %3318 = vmatpush2.bf16.msra.mxu0 0
    %3319 = vmatprep.subr.bf16.mxu0 0
    %3320 = vmatpush2.bf16.msra.mxu0 0
    %3321 = vmatprep.subr.bf16.mxu0 0
    %3322 = vmatpush2.bf16.msra.mxu0 0
    %3323 = vmatprep.subr.bf16.mxu0 0
    %3324 = vmatpush2.bf16.msra.mxu0 0
    %3325 = vmatprep.mubr.bf16.mxu0 0
    %3326 = vmatmul.mubr.bf16.gmra.mxu0 %v3221
    %v3327 = vpop.f32.mrf.mxu0
    %v3328 = vadd.f32 %v3243, %v3327
    %v3329 = vpop.f32.mrf.mxu0
    %v3330 = vpop.f32.mrf.mxu0
    %v3331 = vpop.f32.mrf.mxu0
    %3332 = vdwg.mxu0
    %v3333 = vtanh.pop %v3328
    %vm3334 = vcmask 261120
    %3335 = vst.msk [vmem:[#allocation16] sm:$0xff] %vm3334, %v3333
    // Predicated region
    $region66: #{tpu_custom_call.1} parent=1 // pred_check
      _
    $region67: #{tpu_custom_call.1} parent=1 // pred_check_branch
      %3337 = sbr.rel (0) target = $region69
    $region68: #{tpu_custom_call.1} parent=1 // pred_region
      %s3339 = ssub.s32 128, 128
      %3340 = vsyncadd [#allocation4], %s3339
      %s3342 = sshll.u32 [#allocation16], 4
      %s3343 = int_to_ptr.vmem [resolvable:$true] %s3342
      %3345 = dma.vmem_to_hbm [thread:$0]  %s3343, 128, %s8, [#allocation4]
    $region69: #{tpu_custom_call.1} parent=1 // pred_fallthru
      _
    // Predicated region
    $region70: #{tpu_custom_call.1} parent=1 // pred_check
      _
    $region71: #{tpu_custom_call.1} parent=1 // pred_check_branch
      %3347 = sbr.rel (0) target = $region73
    $region72: #{tpu_custom_call.1} parent=1 // pred_region
      %3348 = dma.done [#allocation4], 128
    $region73: #{tpu_custom_call.1} parent=1 // pred_fallthru
      _
    %3349 = vsyncpa [#allocation3], 1
    %3350 = vsyncpa [#allocation6], 1
    %3351 = vsyncpa [#allocation9], 1
    %3352 = vsyncpa [#allocation12], 1
    %3353 = vsyncpa [#allocation15], 1
    %3354 = vsyncpa [#allocation4], 1

</llo_original>
